<compile_context>
chip_gen: v7x
topology: tpu7x:2x2x1
jax: 0.10.0
libtpu: 0.0.40
codegen_flags: <defaults>
</compile_context>

<pallas_src>
import functools

import jax
import jax.numpy as jnp
import numpy as np
from jax.experimental import pallas as pl
from jax.experimental.pallas import tpu as pltpu


def _block_diag(block, n):
    """Repeat `block` n times along the diagonal (zeros elsewhere). Trace-time only."""
    if n == 1:
        return block
    r, c = block.shape
    out = jnp.zeros((n * r, n * c), dtype=block.dtype)
    for j in range(n):
        out = out.at[j * r:(j + 1) * r, j * c:(j + 1) * c].set(block)
    return out


# ---------------------------------------------------------------------------
# Pallas kernel: one Euler-Maruyama reverse step for a tile of packed rows
# ---------------------------------------------------------------------------
def em_step_kernel(*refs, add_noise):
    # Scalar prefetch : aux (B, 4) f32 in SMEM = [beta*dt, sigma, sqrt(beta*dt), 0]
    # Row-tiled inputs: x (1, TR, P*D) f32, y (1, TR, P*D) bf16, [z (1, TR, P*D) bf16]
    # VMEM residents  : w1x (P*D, P*H) bf16, w1y (P*D, P*H) bf16, b1 (1, P*H) f32,
    #                   wsig (1, P*H) f32, w2 (P*H, P*D) f32, b2 (1, P*D) f32
    # Output          : out (1, TR, P*D) f32
    if add_noise:
        (aux_ref, x_ref, y_ref, z_ref,
         w1x_ref, w1y_ref, b1_ref, wsig_ref, w2_ref, b2_ref, out_ref) = refs
    else:
        (aux_ref, x_ref, y_ref,
         w1x_ref, w1y_ref, b1_ref, wsig_ref, w2_ref, b2_ref, out_ref) = refs
        z_ref = None

    b = pl.program_id(0)
    bdt = aux_ref[b, 0]      # beta(t)*dt == g^2
    sig = aux_ref[b, 1]      # perturb-kernel std
    g = aux_ref[b, 2]        # sqrt(beta(t)*dt) (precomputed in wrapper)

    x = x_ref[0]             # (TR, P*D) f32, lane-dense packed rows

    # score_model(cat([x_t, y], -1), sigma): first layer as two matmuls against
    # block-diagonal weights so the packed sub-rows stay independent and the
    # (M, 2D) concat never exists in HBM.
    h = jnp.dot(x.astype(jnp.bfloat16), w1x_ref[...],
                preferred_element_type=jnp.float32)
    h = h + jnp.dot(y_ref[0], w1y_ref[...], preferred_element_type=jnp.float32)
    h = jnp.tanh(h + b1_ref[...] + sig * wsig_ref[...])
    score = jnp.dot(h, w2_ref[...], preferred_element_type=jnp.float32) + b2_ref[...]

    # reverse step: rev_f = f - g^2*score, f = drift*dt = -0.5*beta*dt*x
    #   x - rev_f = (1 + 0.5*beta*dt)*x + beta*dt*score
    out = (1.0 + 0.5 * bdt) * x + bdt * score
    if add_noise:
        out = out + g * z_ref[0].astype(jnp.float32)
    out_ref[0] = out


# ---------------------------------------------------------------------------
# Wrapper: SDE scalar precompute, lane packing, block-diag weights, pallas_call
# ---------------------------------------------------------------------------
def euler_maruyama_step(x_t, y, t, z=None, params=None, *, dt, beta_min=0.1,
                        beta_max=20.0, add_noise=True, tile_rows=2048):
    B, S, D = x_t.shape
    H = params["w1"].shape[1]
    assert params["w1"].shape[0] == 2 * D

    # ---- lane packing factor: fold `pack` consecutive rows into one 128-lane row
    if D < 128 and 128 % D == 0 and S % (128 // D) == 0:
        pack = 128 // D
    else:
        pack = 1          # fallback: unpacked layout (correct, lane-masked stores)
    PD, PH = pack * D, pack * H
    R = S // pack         # packed rows per batch element

    # ---- per-batch SDE scalars (once, in the wrapper; shipped via scalar prefetch)
    t = t.astype(jnp.float32)
    beta_t = beta_min + t * (beta_max - beta_min)                       # (B,)
    int_beta = beta_min * t + 0.5 * (beta_max - beta_min) * t * t
    sigma_t = jnp.sqrt(1.0 - jnp.exp(-int_beta))                        # (B,)
    bdt_t = beta_t * dt                                                 # g^2
    g_t = jnp.sqrt(bdt_t)                                               # diffusion*sqrt(dt)
    aux = jnp.stack([bdt_t, sigma_t, g_t, jnp.zeros_like(bdt_t)],
                    axis=-1).astype(jnp.float32)                        # (B, 4)

    # ---- lane-dense packed row views (free reshapes: row-major memory is contiguous)
    x_rows = x_t.reshape(B, R, PD).astype(jnp.float32)   # additive base stays f32
    y_rows = y.reshape(B, R, PD).astype(jnp.bfloat16)

    # ---- weights: split W1 (no concat) and expand block-diagonally for packing
    w1 = params["w1"]
    w1x = _block_diag(w1[:D].astype(jnp.bfloat16), pack)                # (PD, PH)
    w1y = _block_diag(w1[D:].astype(jnp.bfloat16), pack)                # (PD, PH)
    b1 = jnp.tile(params["b1"].reshape(1, H).astype(jnp.float32), (1, pack))
    wsig = jnp.tile(params["wsig"].reshape(1, H).astype(jnp.float32), (1, pack))
    w2 = _block_diag(params["w2"].astype(jnp.float32), pack)            # (PH, PD)
    b2 = jnp.tile(params["b2"].reshape(1, D).astype(jnp.float32), (1, pack))

    # ---- tiling over packed rows (big tiles; (8,128) rule: tile is mult. of 8 or full)
    if R <= tile_rows:
        tr = R
    else:
        tr = max(8, (min(tile_rows, R) // 8) * 8)
    grid = (B, pl.cdiv(R, tr))

    row_spec = lambda: pl.BlockSpec((1, tr, PD), lambda b, r, s: (b, r, 0))
    resident = lambda: pl.BlockSpec(memory_space=pltpu.MemorySpace.VMEM)

    in_specs = [row_spec(), row_spec()]                   # x, y
    inputs = [x_rows, y_rows]
    if add_noise:
        in_specs.append(row_spec())                       # z (only when actually used)
        inputs.append(z.reshape(B, R, PD).astype(jnp.bfloat16))
    in_specs += [resident() for _ in range(6)]            # w1x, w1y, b1, wsig, w2, b2
    inputs += [w1x, w1y, b1, wsig, w2, b2]

    out = pl.pallas_call(
        functools.partial(em_step_kernel, add_noise=add_noise),
        out_shape=jax.ShapeDtypeStruct((B, R, PD), jnp.float32),
        grid_spec=pltpu.PrefetchScalarGridSpec(
            num_scalar_prefetch=1,                        # aux -> SMEM scalars
            grid=grid,
            in_specs=in_specs,
            out_specs=pl.BlockSpec((1, tr, PD), lambda b, r, s: (b, r, 0)),
        ),
        compiler_params=pltpu.CompilerParams(
            dimension_semantics=("parallel", "parallel"),
            vmem_limit_bytes=32 * 1024 * 1024,
        ),
    )(aux, *inputs)

    return out.reshape(B, S, D)


# ---------------------------------------------------------------------------
# Pure-JAX reference (mirrors the kernel's precision policy) for verification
# ---------------------------------------------------------------------------
def euler_maruyama_ref(x_t, y, t, z, params, *, dt, beta_min=0.1, beta_max=20.0,
                       add_noise=True):
    B, S, D = x_t.shape
    t = t.astype(jnp.float32)
    beta_t = beta_min + t * (beta_max - beta_min)
    int_beta = beta_min * t + 0.5 * (beta_max - beta_min) * t * t
    sigma_t = jnp.sqrt(1.0 - jnp.exp(-int_beta))

    bdt = (beta_t * dt)[:, None, None].astype(jnp.float32)      # g^2
    sig = sigma_t[:, None, None].astype(jnp.float32)
    g = jnp.sqrt(bdt)

    x32 = x_t.astype(jnp.float32)
    x_bf = x32.astype(jnp.bfloat16).reshape(-1, D)
    y_bf = y.astype(jnp.bfloat16).reshape(-1, D)
    w1x = params["w1"][:D].astype(jnp.bfloat16)
    w1y = params["w1"][D:].astype(jnp.bfloat16)

    h = (jnp.dot(x_bf, w1x, preferred_element_type=jnp.float32)
         + jnp.dot(y_bf, w1y, preferred_element_type=jnp.float32)).reshape(B, S, -1)
    h = jnp.tanh(h + params["b1"].reshape(1, 1, -1).astype(jnp.float32)
                 + sig * params["wsig"].reshape(1, 1, -1).astype(jnp.float32))
    score = (jnp.dot(h.reshape(-1, h.shape[-1]), params["w2"].astype(jnp.float32),
                     preferred_element_type=jnp.float32).reshape(B, S, D)
             + params["b2"].reshape(1, 1, -1).astype(jnp.float32))

    out = (1.0 + 0.5 * bdt) * x32 + bdt * score
    if add_noise:
        out = out + g * z.astype(jnp.bfloat16).astype(jnp.float32)
    return out


if __name__ == "__main__":
    B, S, D, H = 2, 256, 32, 128     # pack = 4 -> lane-dense (B, 64, 128) streams
    dt = 1e-3

    key = jax.random.PRNGKey(0)
    k_x, k_y, k_t, k_z, k_w1, k_b1, k_ws, k_w2, k_b2 = jax.random.split(key, 9)

    x_t = jax.random.normal(k_x, (B, S, D), dtype=jnp.float32)
    y = jax.random.normal(k_y, (B, S, D), dtype=jnp.float32)
    t = jax.random.uniform(k_t, (B,), minval=0.05, maxval=0.95, dtype=jnp.float32)
    z = jax.random.normal(k_z, (B, S, D), dtype=jnp.float32)

    params = {
        "w1": jax.random.normal(k_w1, (2 * D, H), dtype=jnp.float32) * 0.1,
        "b1": jax.random.normal(k_b1, (1, H), dtype=jnp.float32) * 0.01,
        "wsig": jax.random.normal(k_ws, (1, H), dtype=jnp.float32) * 0.1,
        "w2": jax.random.normal(k_w2, (H, D), dtype=jnp.float32) * 0.1,
        "b2": jax.random.normal(k_b2, (1, D), dtype=jnp.float32) * 0.01,
    }

    # Path 1: add_noise=True (kernel variant with z stream)
    out = euler_maruyama_step(x_t, y, t, z, params, dt=dt, add_noise=True)
    out = jax.block_until_ready(out)
    ref = euler_maruyama_ref(x_t, y, t, z, params, dt=dt, add_noise=True)
    np.testing.assert_allclose(np.asarray(out), np.asarray(ref), rtol=1e-4, atol=1e-5)

    # Path 2: add_noise=False (kernel variant without any z DMA)
    out_nn = euler_maruyama_step(x_t, y, t, None, params, dt=dt, add_noise=False)
    out_nn = jax.block_until_ready(out_nn)
    ref_nn = euler_maruyama_ref(x_t, y, t, z, params, dt=dt, add_noise=False)
    np.testing.assert_allclose(np.asarray(out_nn), np.asarray(ref_nn), rtol=1e-4, atol=1e-5)

    print("KERNEL_OK")
</pallas_src>

<mosaic_0001>
module attributes {stable_mosaic.version = 11 : i64} {
  func.func @em_step_kernel(%arg0: i32, %arg1: i32, %arg2: memref<2x4xf32, #tpu.memory_space<smem>>, %arg3: memref<1x64x128xf32, #tpu.memory_space<vmem>>, %arg4: memref<1x64x128xbf16, #tpu.memory_space<vmem>>, %arg5: memref<1x64x128xbf16, #tpu.memory_space<vmem>>, %arg6: memref<128x512xbf16, #tpu.memory_space<vmem>>, %arg7: memref<128x512xbf16, #tpu.memory_space<vmem>>, %arg8: memref<1x512xf32, #tpu.memory_space<vmem>>, %arg9: memref<1x512xf32, #tpu.memory_space<vmem>>, %arg10: memref<512x128xf32, #tpu.memory_space<vmem>>, %arg11: memref<1x128xf32, #tpu.memory_space<vmem>>, %arg12: memref<1x64x128xf32, #tpu.memory_space<vmem>>) attributes {dimension_semantics = [#tpu.dimension_semantics<parallel>, #tpu.dimension_semantics<parallel>], iteration_bounds = array<i64: 2, 1>, scalar_prefetch = 1 : i64, scratch_operands = 0 : i64, tpu.core_type = #tpu.core_type<tc>, window_params = [{transform_indices = @transform_0, window_bounds = array<i64: 1, 64, 128>}, {transform_indices = @transform_1, window_bounds = array<i64: 1, 64, 128>}, {transform_indices = @transform_2, window_bounds = array<i64: 1, 64, 128>}, {pipeline_mode = #tpu.pipeline_mode<synchronous>, transform_indices = @transform_3, window_bounds = array<i64: 128, 512>}, {pipeline_mode = #tpu.pipeline_mode<synchronous>, transform_indices = @transform_4, window_bounds = array<i64: 128, 512>}, {pipeline_mode = #tpu.pipeline_mode<synchronous>, transform_indices = @transform_5, window_bounds = array<i64: 1, 512>}, {pipeline_mode = #tpu.pipeline_mode<synchronous>, transform_indices = @transform_6, window_bounds = array<i64: 1, 512>}, {pipeline_mode = #tpu.pipeline_mode<synchronous>, transform_indices = @transform_7, window_bounds = array<i64: 512, 128>}, {pipeline_mode = #tpu.pipeline_mode<synchronous>, transform_indices = @transform_8, window_bounds = array<i64: 1, 128>}, {transform_indices = @transform_9, window_bounds = array<i64: 1, 64, 128>}]} {
    %0 = arith.index_cast %arg0 : i32 to index
    %c0 = arith.constant 0 : index
    %1 = memref.load %arg2[%0, %c0] : memref<2x4xf32, #tpu.memory_space<smem>>
    %2 = arith.index_cast %arg0 : i32 to index
    %c1 = arith.constant 1 : index
    %3 = memref.load %arg2[%2, %c1] : memref<2x4xf32, #tpu.memory_space<smem>>
    %4 = arith.index_cast %arg0 : i32 to index
    %c2 = arith.constant 2 : index
    %5 = memref.load %arg2[%4, %c2] : memref<2x4xf32, #tpu.memory_space<smem>>
    %c0_0 = arith.constant 0 : index
    %c0_1 = arith.constant 0 : index
    %c0_2 = arith.constant 0 : index
    %6 = vector.load %arg3[%c0_0, %c0_1, %c0_2] : memref<1x64x128xf32, #tpu.memory_space<vmem>>, vector<1x64x128xf32>
    %7 = vector.shape_cast %6 : vector<1x64x128xf32> to vector<64x128xf32>
    %8 = arith.truncf %7 : vector<64x128xf32> to vector<64x128xbf16>
    %c0_3 = arith.constant 0 : index
    %c0_4 = arith.constant 0 : index
    %9 = vector.load %arg6[%c0_3, %c0_4] : memref<128x512xbf16, #tpu.memory_space<vmem>>, vector<128x512xbf16>
    %cst = arith.constant dense<0.000000e+00> : vector<64x512xf32>
    %10 = tpu.matmul %8, %9, %cst {dimension_numbers = #tpu.dot_dimension_numbers<[1], [0], [0], [1], [0, 0, 1, 1], [], []>} : vector<64x128xbf16>, vector<128x512xbf16>, vector<64x512xf32> -> vector<64x512xf32>
    %c0_5 = arith.constant 0 : index
    %c0_6 = arith.constant 0 : index
    %c0_7 = arith.constant 0 : index
    %11 = vector.load %arg4[%c0_5, %c0_6, %c0_7] : memref<1x64x128xbf16, #tpu.memory_space<vmem>>, vector<1x64x128xbf16>
    %12 = vector.shape_cast %11 : vector<1x64x128xbf16> to vector<64x128xbf16>
    %c0_8 = arith.constant 0 : index
    %c0_9 = arith.constant 0 : index
    %13 = vector.load %arg7[%c0_8, %c0_9] : memref<128x512xbf16, #tpu.memory_space<vmem>>, vector<128x512xbf16>
    %cst_10 = arith.constant dense<0.000000e+00> : vector<64x512xf32>
    %14 = tpu.matmul %12, %13, %cst_10 {dimension_numbers = #tpu.dot_dimension_numbers<[1], [0], [0], [1], [0, 0, 1, 1], [], []>} : vector<64x128xbf16>, vector<128x512xbf16>, vector<64x512xf32> -> vector<64x512xf32>
    %15 = arith.addf %10, %14 : vector<64x512xf32>
    %c0_11 = arith.constant 0 : index
    %c0_12 = arith.constant 0 : index
    %16 = vector.load %arg8[%c0_11, %c0_12] : memref<1x512xf32, #tpu.memory_space<vmem>>, vector<1x512xf32>
    %17 = vector.broadcast %16 : vector<1x512xf32> to vector<64x512xf32>
    %18 = arith.addf %15, %17 : vector<64x512xf32>
    %c0_13 = arith.constant 0 : index
    %c0_14 = arith.constant 0 : index
    %19 = vector.load %arg9[%c0_13, %c0_14] : memref<1x512xf32, #tpu.memory_space<vmem>>, vector<1x512xf32>
    %20 = vector.broadcast %3 : f32 to vector<1x512xf32>
    %21 = arith.mulf %20, %19 : vector<1x512xf32>
    %22 = vector.broadcast %21 : vector<1x512xf32> to vector<64x512xf32>
    %23 = arith.addf %18, %22 : vector<64x512xf32>
    %24 = math.tanh %23 : vector<64x512xf32>
    %c0_15 = arith.constant 0 : index
    %c0_16 = arith.constant 0 : index
    %25 = vector.load %arg10[%c0_15, %c0_16] : memref<512x128xf32, #tpu.memory_space<vmem>>, vector<512x128xf32>
    %cst_17 = arith.constant dense<0.000000e+00> : vector<64x128xf32>
    %26 = tpu.matmul %24, %25, %cst_17 {dimension_numbers = #tpu.dot_dimension_numbers<[1], [0], [0], [1], [0, 0, 1, 1], [], []>} : vector<64x512xf32>, vector<512x128xf32>, vector<64x128xf32> -> vector<64x128xf32>
    %c0_18 = arith.constant 0 : index
    %c0_19 = arith.constant 0 : index
    %27 = vector.load %arg11[%c0_18, %c0_19] : memref<1x128xf32, #tpu.memory_space<vmem>>, vector<1x128xf32>
    %28 = vector.broadcast %27 : vector<1x128xf32> to vector<64x128xf32>
    %29 = arith.addf %26, %28 : vector<64x128xf32>
    %cst_20 = arith.constant 5.000000e-01 : f32
    %30 = arith.mulf %cst_20, %1 : f32
    %cst_21 = arith.constant 1.000000e+00 : f32
    %31 = arith.addf %cst_21, %30 : f32
    %32 = vector.broadcast %31 : f32 to vector<64x128xf32>
    %33 = arith.mulf %32, %7 : vector<64x128xf32>
    %34 = vector.broadcast %1 : f32 to vector<64x128xf32>
    %35 = arith.mulf %34, %29 : vector<64x128xf32>
    %36 = arith.addf %33, %35 : vector<64x128xf32>
    %c0_22 = arith.constant 0 : index
    %c0_23 = arith.constant 0 : index
    %c0_24 = arith.constant 0 : index
    %37 = vector.load %arg5[%c0_22, %c0_23, %c0_24] : memref<1x64x128xbf16, #tpu.memory_space<vmem>>, vector<1x64x128xbf16>
    %38 = vector.shape_cast %37 : vector<1x64x128xbf16> to vector<64x128xbf16>
    %39 = arith.extf %38 : vector<64x128xbf16> to vector<64x128xf32>
    %40 = vector.broadcast %5 : f32 to vector<64x128xf32>
    %41 = arith.mulf %40, %39 : vector<64x128xf32>
    %42 = arith.addf %36, %41 : vector<64x128xf32>
    %c0_25 = arith.constant 0 : index
    %c0_26 = arith.constant 0 : index
    %c0_27 = arith.constant 0 : index
    %43 = vector.load %arg12[%c0_25, %c0_26, %c0_27] : memref<1x64x128xf32, #tpu.memory_space<vmem>>, vector<1x64x128xf32>
    %44 = vector.shape_cast %43 : vector<1x64x128xf32> to vector<64x128xf32>
    %45 = vector.shape_cast %42 : vector<64x128xf32> to vector<1x64x128xf32>
    tpu.vector_store %arg12[%c0_25, %c0_26, %c0_27], %45 {strides = array<i32>} : memref<1x64x128xf32, #tpu.memory_space<vmem>>, vector<1x64x128xf32>,
    return
  }
  func.func @transform_0(%arg0: i32, %arg1: i32, %arg2: memref<2x4xf32, #tpu.memory_space<smem>>) -> (i32, i32, i32) {
    %c0_i32 = arith.constant 0 : i32
    %c0_i32_0 = arith.constant 0 : i32
    return %arg0, %arg1, %c0_i32 : i32, i32, i32
  }
  func.func @transform_1(%arg0: i32, %arg1: i32, %arg2: memref<2x4xf32, #tpu.memory_space<smem>>) -> (i32, i32, i32) {
    %c0_i32 = arith.constant 0 : i32
    %c0_i32_0 = arith.constant 0 : i32
    return %arg0, %arg1, %c0_i32 : i32, i32, i32
  }
  func.func @transform_2(%arg0: i32, %arg1: i32, %arg2: memref<2x4xf32, #tpu.memory_space<smem>>) -> (i32, i32, i32) {
    %c0_i32 = arith.constant 0 : i32
    %c0_i32_0 = arith.constant 0 : i32
    return %arg0, %arg1, %c0_i32 : i32, i32, i32
  }
  func.func @transform_3(%arg0: i32, %arg1: i32, %arg2: memref<2x4xf32, #tpu.memory_space<smem>>) -> (i32, i32) {
    %c0_i32 = arith.constant 0 : i32
    %c0_i32_0 = arith.constant 0 : i32
    %c0_i32_1 = arith.constant 0 : i32
    return %c0_i32, %c0_i32_0 : i32, i32
  }
  func.func @transform_4(%arg0: i32, %arg1: i32, %arg2: memref<2x4xf32, #tpu.memory_space<smem>>) -> (i32, i32) {
    %c0_i32 = arith.constant 0 : i32
    %c0_i32_0 = arith.constant 0 : i32
    %c0_i32_1 = arith.constant 0 : i32
    return %c0_i32, %c0_i32_0 : i32, i32
  }
  func.func @transform_5(%arg0: i32, %arg1: i32, %arg2: memref<2x4xf32, #tpu.memory_space<smem>>) -> (i32, i32) {
    %c0_i32 = arith.constant 0 : i32
    %c0_i32_0 = arith.constant 0 : i32
    %c0_i32_1 = arith.constant 0 : i32
    return %c0_i32, %c0_i32_0 : i32, i32
  }
  func.func @transform_6(%arg0: i32, %arg1: i32, %arg2: memref<2x4xf32, #tpu.memory_space<smem>>) -> (i32, i32) {
    %c0_i32 = arith.constant 0 : i32
    %c0_i32_0 = arith.constant 0 : i32
    %c0_i32_1 = arith.constant 0 : i32
    return %c0_i32, %c0_i32_0 : i32, i32
  }
  func.func @transform_7(%arg0: i32, %arg1: i32, %arg2: memref<2x4xf32, #tpu.memory_space<smem>>) -> (i32, i32) {
    %c0_i32 = arith.constant 0 : i32
    %c0_i32_0 = arith.constant 0 : i32
    %c0_i32_1 = arith.constant 0 : i32
    return %c0_i32, %c0_i32_0 : i32, i32
  }
  func.func @transform_8(%arg0: i32, %arg1: i32, %arg2: memref<2x4xf32, #tpu.memory_space<smem>>) -> (i32, i32) {
    %c0_i32 = arith.constant 0 : i32
    %c0_i32_0 = arith.constant 0 : i32
    %c0_i32_1 = arith.constant 0 : i32
    return %c0_i32, %c0_i32_0 : i32, i32
  }
  func.func @transform_9(%arg0: i32, %arg1: i32, %arg2: memref<2x4xf32, #tpu.memory_space<smem>>) -> (i32, i32, i32) {
    %c0_i32 = arith.constant 0 : i32
    %c0_i32_0 = arith.constant 0 : i32
    return %arg0, %arg1, %c0_i32 : i32, i32, i32
  }
}

</mosaic_0001>

<llo_original>
// kernel: tpu_custom_call.1
$region0: #{tpu_custom_call.1}
  #allocation0 [shape = 'u32[]', space=smem, size = 0x4, offset = 0x4, fixed_abs, tag = 'smem constant byte address 0x4 - core index']
  #allocation1 [shape = 'u32[144,128]{1,0:T(1,128)}', space=vmem, size = 0x12000, scoped, tag = 'internal scratch']
  #allocation2 [shape = 's32[1]{0}', space=sflag, size = 0x4, scoped, tag = 'scoped memory for tpu_custom_call.1']
  #allocation3 [shape = 'u8[1024]{0}', space=smem, size = 0x400, scoped, tag = 'prefetched SMEM operand 0']
  %s0 = inlined_call_operand.hbm [shape: f32[2,4], index: 0, kind: input, shape index: {}]
  %s1 = inlined_call_operand.hbm [shape: f32[2,64,128], index: 1, kind: input, shape index: {}]
  %s2 = inlined_call_operand.hbm [shape: bf16[2,64,128], index: 2, kind: input, shape index: {}]
  %s3 = inlined_call_operand.hbm [shape: bf16[2,64,128], index: 3, kind: input, shape index: {}]
  %s4 = inlined_call_operand.hbm [shape: bf16[128,512], index: 4, kind: input, shape index: {}]
  %s5 = inlined_call_operand.hbm [shape: bf16[128,512], index: 5, kind: input, shape index: {}]
  %s6 = inlined_call_operand.vmem [shape: f32[1,512], index: 6, kind: input, shape index: {}]
  %s7 = inlined_call_operand.vmem [shape: f32[1,512], index: 7, kind: input, shape index: {}]
  %s8 = inlined_call_operand.hbm [shape: f32[512,128], index: 8, kind: input, shape index: {}]
  %s9 = inlined_call_operand.vmem [shape: f32[1,128], index: 9, kind: input, shape index: {}]
  %s10 = inlined_call_operand.hbm [shape: f32[2,64,128], index: 10, kind: output, shape index: {}]
  %s11 = sld [smem:[#allocation0]]
  $region93: #{tpu_custom_call.1} parent=0
    _
  %s13 = ssub.s32 1, %s11
  %s14 = scalar_select 0, %s13, %s11
  %16 = dma.hbm_to_smem %s0, 32, [#allocation3], [#allocation2]
  %17 = dma.done [#allocation2], 32
  %18 = sfence
  $region1: #{tpu_custom_call.1} parent=0
    #allocation4 [shape = 'u8[65536]{0}', space=vmem, size = 0x10000, scoped, tag = 'input window, operand 1']
    #allocation5 [shape = 's32[2]{0}', space=sflag, size = 0x8, scoped, tag = 'scoped memory for tpu_custom_call.1']
    #allocation6 [shape = 's32[2]{0}', space=sflag, size = 0x8, scoped, tag = 'scoped memory for tpu_custom_call.1']
    #allocation7 [shape = 'u8[32768]{0}', space=vmem, size = 0x8000, scoped, tag = 'input window, operand 2']
    #allocation8 [shape = 's32[2]{0}', space=sflag, size = 0x8, scoped, tag = 'scoped memory for tpu_custom_call.1']
    #allocation9 [shape = 'u8[32768]{0}', space=vmem, size = 0x8000, scoped, tag = 'input window, operand 3']
    #allocation10 [shape = 'u8[131072]{0}', space=vmem, size = 0x20000, scoped, tag = 'input window, operand 4, single buffered']
    #allocation11 [shape = 's32[1]{0}', space=sflag, size = 0x4, scoped, tag = 'scoped memory for tpu_custom_call.1']
    #allocation12 [shape = 'u8[131072]{0}', space=vmem, size = 0x20000, scoped, tag = 'input window, operand 5, single buffered']
    #allocation13 [shape = 'u8[262144]{0}', space=vmem, size = 0x40000, scoped, tag = 'input window, operand 8, single buffered']
    #allocation14 [shape = 's32[1]{0}', space=sflag, size = 0x4, scoped, tag = 'scoped memory for tpu_custom_call.1']
    #allocation15 [shape = 'u8[65536]{0}', space=vmem, size = 0x10000, scoped, tag = 'output window, operand 0']
    %19 = vsyncpa [#allocation5], 0
    %s20 = scalar_lea.sflag [#allocation5], 1
    %21 = vsyncpa %s20, 0
    %22 = vsyncpa [#allocation8], 0
    %s23 = scalar_lea.sflag [#allocation8], 1
    %24 = vsyncpa %s23, 0
    %25 = vsyncpa [#allocation11], 0
    %26 = vsyncpa [#allocation14], 0
    %27 = vsyncpa [#allocation6], 0
    %s28 = scalar_lea.sflag [#allocation6], 1
    %29 = vsyncpa %s28, 0
    loop: start=0, step=1, limit=4
    $region2: #{tpu_custom_call.1} parent=1 // loop_pre_header
      _
    $region3: #{tpu_custom_call.1} parent=1 // loop_header
      %s31 = sphi 0, %s35
      %p32 = scmp.ge.s32.totalorder %s31, 4
      %s38 = sphi 0, %s50
      %s39 = sphi 0, %s46
      %s40 = sphi 0, %s38
      %s41 = sphi 0, %s39
      %s42 = sphi 0, %s40
      %s43 = sphi 0, %s41
      %s55 = sphi 0, %s57
      %s58 = sphi 0, %s55
      %s59 = sphi 0, %s58
      %s75 = sphi 0, %s59
      %s83 = sphi 0, %s85
      %s86 = sphi 0, %s83
      %s87 = sphi 0, %s86
      %s103 = sphi 0, %s87
      %s111 = sphi 0, %s113
      %s114 = sphi 0, %s111
      %s115 = sphi 0, %s114
      %s131 = sphi 0, %s115
      %s135 = sphi 0, %s135
      %s137 = sphi 0, %s135
      %s138 = sphi 0, %s137
      %s152 = sphi 0, %s138
      %s156 = sphi 0, %s156
      %s158 = sphi 0, %s156
      %s159 = sphi 0, %s158
      %s173 = sphi 0, %s159
      %s177 = sphi 0, %s177
      %s179 = sphi 0, %s177
      %s180 = sphi 0, %s179
      %s194 = sphi 0, %s180
      %s198 = sphi 0, %s198
      %s200 = sphi 0, %s198
      %s201 = sphi 0, %s200
      %s215 = sphi 0, %s201
      %s219 = sphi 0, %s219
      %s221 = sphi 0, %s219
      %s222 = sphi 0, %s221
      %s236 = sphi 0, %s222
      %s240 = sphi 0, %s240
      %s242 = sphi 0, %s240
      %s243 = sphi 0, %s242
      %s257 = sphi 0, %s243
      %s265 = sphi 0, %s267
      %s268 = sphi 0, %s265
      %s269 = sphi 0, %s268
      %s285 = sphi 0, %s269
    $region4: #{tpu_custom_call.1} parent=1 // loop_header_branch
      %34 = sbr.rel (%p32) target = $region8
    $region5: #{tpu_custom_call.1} parent=1 // loop_body
      %s36 = ssub.s32 %s31, 1
      %s37 = ssub.s32 %s31, 2
      %s44 = sadd.s32 1, %s39
      %p45 = scmp.ge.s32.totalorder %s44, 1
      %s46 = scalar_select %p45, 0, %s44
      %s47 = sadd.s32 1, %s38
      %s48 = scalar_select %p45, %s47, %s38
      %p49 = scmp.ge.s32.totalorder %s48, 2
      %s50 = scalar_select %p49, 0, %s48
      %s51 = ssub.s32 %s38, %s50
      %s52 = ssub.s32 %s39, %s46
      %s53 = sor.u32 %s51, %s52
      %p54 = scmp.eq.s32.totalorder %s53, 0
      %s56 = sadd.s32 %s55, 1
      %s57 = scalar_select %p54, %s55, %s56
      %p60 = pneg %p54
      %p61 = scmp.eq.s32.totalorder %s31, 1
      %p62 = por %p60, %p61
      %p63 = scmp.ne.s32.totalorder %s55, %s58
      %p64 = scmp.eq.s32.totalorder %s31, 0
      %p65 = por %p63, %p64
      %p66 = scmp.ne.s32.totalorder %s55, %s58
      %p67 = scmp.eq.s32.totalorder %s36, 1
      %p68 = por %p66, %p67
      %p69 = scmp.ne.s32.totalorder %s58, %s59
      %p70 = scmp.eq.s32.totalorder %s36, 0
      %p71 = por %p69, %p70
      %p72 = scmp.ne.s32.totalorder %s58, %s59
      %p73 = scmp.eq.s32.totalorder %s37, 1
      %p74 = por %p72, %p73
      %p76 = scmp.ne.s32.totalorder %s59, %s75
      %p77 = scmp.eq.s32.totalorder %s37, 0
      %p78 = por %p76, %p77
      %s79 = ssub.s32 %s38, %s50
      %s80 = ssub.s32 %s39, %s46
      %s81 = sor.u32 %s79, %s80
      %p82 = scmp.eq.s32.totalorder %s81, 0
      %s84 = sadd.s32 %s83, 1
      %s85 = scalar_select %p82, %s83, %s84
      %p88 = pneg %p82
      %p89 = scmp.eq.s32.totalorder %s31, 1
      %p90 = por %p88, %p89
      %p91 = scmp.ne.s32.totalorder %s83, %s86
      %p92 = scmp.eq.s32.totalorder %s31, 0
      %p93 = por %p91, %p92
      %p94 = scmp.ne.s32.totalorder %s83, %s86
      %p95 = scmp.eq.s32.totalorder %s36, 1
      %p96 = por %p94, %p95
      %p97 = scmp.ne.s32.totalorder %s86, %s87
      %p98 = scmp.eq.s32.totalorder %s36, 0
      %p99 = por %p97, %p98
      %p100 = scmp.ne.s32.totalorder %s86, %s87
      %p101 = scmp.eq.s32.totalorder %s37, 1
      %p102 = por %p100, %p101
      %p104 = scmp.ne.s32.totalorder %s87, %s103
      %p105 = scmp.eq.s32.totalorder %s37, 0
      %p106 = por %p104, %p105
      %s107 = ssub.s32 %s38, %s50
      %s108 = ssub.s32 %s39, %s46
      %s109 = sor.u32 %s107, %s108
      %p110 = scmp.eq.s32.totalorder %s109, 0
      %s112 = sadd.s32 %s111, 1
      %s113 = scalar_select %p110, %s111, %s112
      %p116 = pneg %p110
      %p117 = scmp.eq.s32.totalorder %s31, 1
      %p118 = por %p116, %p117
      %p119 = scmp.ne.s32.totalorder %s111, %s114
      %p120 = scmp.eq.s32.totalorder %s31, 0
      %p121 = por %p119, %p120
      %p122 = scmp.ne.s32.totalorder %s111, %s114
      %p123 = scmp.eq.s32.totalorder %s36, 1
      %p124 = por %p122, %p123
      %p125 = scmp.ne.s32.totalorder %s114, %s115
      %p126 = scmp.eq.s32.totalorder %s36, 0
      %p127 = por %p125, %p126
      %p128 = scmp.ne.s32.totalorder %s114, %s115
      %p129 = scmp.eq.s32.totalorder %s37, 1
      %p130 = por %p128, %p129
      %p132 = scmp.ne.s32.totalorder %s115, %s131
      %p133 = scmp.eq.s32.totalorder %s37, 0
      %p134 = por %p132, %p133
      %s136 = sadd.s32 %s135, 1
      %p139 = scmp.eq.s32.totalorder %s31, 1
      %p140 = scmp.ne.s32.totalorder %s135, %s137
      %p141 = scmp.eq.s32.totalorder %s31, 0
      %p142 = por %p140, %p141
      %p143 = scmp.ne.s32.totalorder %s135, %s137
      %p144 = scmp.eq.s32.totalorder %s36, 1
      %p145 = por %p143, %p144
      %p146 = scmp.ne.s32.totalorder %s137, %s138
      %p147 = scmp.eq.s32.totalorder %s36, 0
      %p148 = por %p146, %p147
      %p149 = scmp.ne.s32.totalorder %s137, %s138
      %p150 = scmp.eq.s32.totalorder %s37, 1
      %p151 = por %p149, %p150
      %p153 = scmp.ne.s32.totalorder %s138, %s152
      %p154 = scmp.eq.s32.totalorder %s37, 0
      %p155 = por %p153, %p154
      %s157 = sadd.s32 %s156, 1
      %p160 = scmp.eq.s32.totalorder %s31, 1
      %p161 = scmp.ne.s32.totalorder %s156, %s158
      %p162 = scmp.eq.s32.totalorder %s31, 0
      %p163 = por %p161, %p162
      %p164 = scmp.ne.s32.totalorder %s156, %s158
      %p165 = scmp.eq.s32.totalorder %s36, 1
      %p166 = por %p164, %p165
      %p167 = scmp.ne.s32.totalorder %s158, %s159
      %p168 = scmp.eq.s32.totalorder %s36, 0
      %p169 = por %p167, %p168
      %p170 = scmp.ne.s32.totalorder %s158, %s159
      %p171 = scmp.eq.s32.totalorder %s37, 1
      %p172 = por %p170, %p171
      %p174 = scmp.ne.s32.totalorder %s159, %s173
      %p175 = scmp.eq.s32.totalorder %s37, 0
      %p176 = por %p174, %p175
      %s178 = sadd.s32 %s177, 1
      %p181 = scmp.eq.s32.totalorder %s31, 1
      %p182 = scmp.ne.s32.totalorder %s177, %s179
      %p183 = scmp.eq.s32.totalorder %s31, 0
      %p184 = por %p182, %p183
      %p185 = scmp.ne.s32.totalorder %s177, %s179
      %p186 = scmp.eq.s32.totalorder %s36, 1
      %p187 = por %p185, %p186
      %p188 = scmp.ne.s32.totalorder %s179, %s180
      %p189 = scmp.eq.s32.totalorder %s36, 0
      %p190 = por %p188, %p189
      %p191 = scmp.ne.s32.totalorder %s179, %s180
      %p192 = scmp.eq.s32.totalorder %s37, 1
      %p193 = por %p191, %p192
      %p195 = scmp.ne.s32.totalorder %s180, %s194
      %p196 = scmp.eq.s32.totalorder %s37, 0
      %p197 = por %p195, %p196
      %s199 = sadd.s32 %s198, 1
      %p202 = scmp.eq.s32.totalorder %s31, 1
      %p203 = scmp.ne.s32.totalorder %s198, %s200
      %p204 = scmp.eq.s32.totalorder %s31, 0
      %p205 = por %p203, %p204
      %p206 = scmp.ne.s32.totalorder %s198, %s200
      %p207 = scmp.eq.s32.totalorder %s36, 1
      %p208 = por %p206, %p207
      %p209 = scmp.ne.s32.totalorder %s200, %s201
      %p210 = scmp.eq.s32.totalorder %s36, 0
      %p211 = por %p209, %p210
      %p212 = scmp.ne.s32.totalorder %s200, %s201
      %p213 = scmp.eq.s32.totalorder %s37, 1
      %p214 = por %p212, %p213
      %p216 = scmp.ne.s32.totalorder %s201, %s215
      %p217 = scmp.eq.s32.totalorder %s37, 0
      %p218 = por %p216, %p217
      %s220 = sadd.s32 %s219, 1
      %p223 = scmp.eq.s32.totalorder %s31, 1
      %p224 = scmp.ne.s32.totalorder %s219, %s221
      %p225 = scmp.eq.s32.totalorder %s31, 0
      %p226 = por %p224, %p225
      %p227 = scmp.ne.s32.totalorder %s219, %s221
      %p228 = scmp.eq.s32.totalorder %s36, 1
      %p229 = por %p227, %p228
      %p230 = scmp.ne.s32.totalorder %s221, %s222
      %p231 = scmp.eq.s32.totalorder %s36, 0
      %p232 = por %p230, %p231
      %p233 = scmp.ne.s32.totalorder %s221, %s222
      %p234 = scmp.eq.s32.totalorder %s37, 1
      %p235 = por %p233, %p234
      %p237 = scmp.ne.s32.totalorder %s222, %s236
      %p238 = scmp.eq.s32.totalorder %s37, 0
      %p239 = por %p237, %p238
      %s241 = sadd.s32 %s240, 1
      %p244 = scmp.eq.s32.totalorder %s31, 1
      %p245 = scmp.ne.s32.totalorder %s240, %s242
      %p246 = scmp.eq.s32.totalorder %s31, 0
      %p247 = por %p245, %p246
      %p248 = scmp.ne.s32.totalorder %s240, %s242
      %p249 = scmp.eq.s32.totalorder %s36, 1
      %p250 = por %p248, %p249
      %p251 = scmp.ne.s32.totalorder %s242, %s243
      %p252 = scmp.eq.s32.totalorder %s36, 0
      %p253 = por %p251, %p252
      %p254 = scmp.ne.s32.totalorder %s242, %s243
      %p255 = scmp.eq.s32.totalorder %s37, 1
      %p256 = por %p254, %p255
      %p258 = scmp.ne.s32.totalorder %s243, %s257
      %p259 = scmp.eq.s32.totalorder %s37, 0
      %p260 = por %p258, %p259
      %s261 = ssub.s32 %s38, %s50
      %s262 = ssub.s32 %s39, %s46
      %s263 = sor.u32 %s261, %s262
      %p264 = scmp.eq.s32.totalorder %s263, 0
      %s266 = sadd.s32 %s265, 1
      %s267 = scalar_select %p264, %s265, %s266
      %p270 = pneg %p264
      %p271 = scmp.eq.s32.totalorder %s31, 1
      %p272 = por %p270, %p271
      %p273 = scmp.ne.s32.totalorder %s265, %s268
      %p274 = scmp.eq.s32.totalorder %s31, 0
      %p275 = por %p273, %p274
      %p276 = scmp.ne.s32.totalorder %s265, %s268
      %p277 = scmp.eq.s32.totalorder %s36, 1
      %p278 = por %p276, %p277
      %p279 = scmp.ne.s32.totalorder %s268, %s269
      %p280 = scmp.eq.s32.totalorder %s36, 0
      %p281 = por %p279, %p280
      %p282 = scmp.ne.s32.totalorder %s268, %s269
      %p283 = scmp.eq.s32.totalorder %s37, 1
      %p284 = por %p282, %p283
      %p286 = scmp.ne.s32.totalorder %s269, %s285
      %p287 = scmp.eq.s32.totalorder %s37, 0
      %p288 = por %p286, %p287
      %p289 = scmp.le.s32.totalorder 1, %s31
      %p290 = scmp.lt.s32.totalorder %s31, 3
      %p291 = pnand %p289, %p290
      %p292 = pneg %p291
      // Predicated region
      $region9: #{tpu_custom_call.1} parent=5 // pred_check
        _
      $region10: #{tpu_custom_call.1} parent=5 // pred_check_branch
        %294 = sbr.rel (%p291) target = $region12
      $region11: #{tpu_custom_call.1} parent=5 // pred_region
        %s295 = ssub.s32 %s31, 1
        // Predicated region
        $region13: #{tpu_custom_call.1} parent=11 // pred_check
          %p296 = pneg %p148
        $region14: #{tpu_custom_call.1} parent=11 // pred_check_branch
          %298 = sbr.rel (%p296) target = $region16
        $region15: #{tpu_custom_call.1} parent=11 // pred_region
          %s300 = ssub.s32 4096, 4096
          %301 = vsyncadd [#allocation11], %s300
          %s302 = sshll.u32 [#allocation10], 4
          %s303 = int_to_ptr.vmem [resolvable:$true] %s302
          %308 = dma.hbm_to_vmem [thread:$0]  %s4, 4096, %s303, [#allocation11], 256, 256, 16
        $region16: #{tpu_custom_call.1} parent=11 // pred_fallthru
          _
        // Predicated region
        $region17: #{tpu_custom_call.1} parent=11 // pred_check
          %p309 = pneg %p169
        $region18: #{tpu_custom_call.1} parent=11 // pred_check_branch
          %311 = sbr.rel (%p309) target = $region20
        $region19: #{tpu_custom_call.1} parent=11 // pred_region
          %s313 = ssub.s32 4096, 4096
          %314 = vsyncadd [#allocation11], %s313
          %s315 = sshll.u32 [#allocation12], 4
          %s316 = int_to_ptr.vmem [resolvable:$true] %s315
          %321 = dma.hbm_to_vmem [thread:$0]  %s5, 4096, %s316, [#allocation11], 256, 256, 16
        $region20: #{tpu_custom_call.1} parent=11 // pred_fallthru
          _
        // Predicated region
        $region21: #{tpu_custom_call.1} parent=11 // pred_check
          %p322 = pneg %p190
        $region22: #{tpu_custom_call.1} parent=11 // pred_check_branch
          %324 = sbr.rel (%p322) target = $region24
        $region23: #{tpu_custom_call.1} parent=11 // pred_region
          _
        $region24: #{tpu_custom_call.1} parent=11 // pred_fallthru
          _
        // Predicated region
        $region25: #{tpu_custom_call.1} parent=11 // pred_check
          %p325 = pneg %p211
        $region26: #{tpu_custom_call.1} parent=11 // pred_check_branch
          %327 = sbr.rel (%p325) target = $region28
        $region27: #{tpu_custom_call.1} parent=11 // pred_region
          _
        $region28: #{tpu_custom_call.1} parent=11 // pred_fallthru
          _
        // Predicated region
        $region29: #{tpu_custom_call.1} parent=11 // pred_check
          %p328 = pneg %p232
        $region30: #{tpu_custom_call.1} parent=11 // pred_check_branch
          %330 = sbr.rel (%p328) target = $region32
        $region31: #{tpu_custom_call.1} parent=11 // pred_region
          %s332 = ssub.s32 8192, 8192
          %333 = vsyncadd [#allocation14], %s332
          %s334 = sshll.u32 [#allocation13], 4
          %s335 = int_to_ptr.vmem [resolvable:$true] %s334
          %340 = dma.hbm_to_vmem [thread:$0]  %s8, 8192, %s335, [#allocation14], 128, 128, 8
        $region32: #{tpu_custom_call.1} parent=11 // pred_fallthru
          _
        // Predicated region
        $region33: #{tpu_custom_call.1} parent=11 // pred_check
          %p341 = pneg %p253
        $region34: #{tpu_custom_call.1} parent=11 // pred_check_branch
          %343 = sbr.rel (%p341) target = $region36
        $region35: #{tpu_custom_call.1} parent=11 // pred_region
          _
        $region36: #{tpu_custom_call.1} parent=11 // pred_fallthru
          _
      $region12: #{tpu_custom_call.1} parent=5 // pred_fallthru
        _
      %p344 = scmp.lt.s32.totalorder %s31, 2
      // Predicated region
      $region37: #{tpu_custom_call.1} parent=5 // pred_check
        %p345 = pneg %p344
      $region38: #{tpu_custom_call.1} parent=5 // pred_check_branch
        %347 = sbr.rel (%p345) target = $region40
      $region39: #{tpu_custom_call.1} parent=5 // pred_region
        // Predicated region
        $region41: #{tpu_custom_call.1} parent=39 // pred_check
          %p348 = pneg %p65
        $region42: #{tpu_custom_call.1} parent=39 // pred_check_branch
          %350 = sbr.rel (%p348) target = $region44
        $region43: #{tpu_custom_call.1} parent=39 // pred_region
          %s351 = sand.u32 %s55, 1
          %s352 = scalar_lea.sflag [#allocation5], %s351
          %s353 = sand.u32 %s55, 1
          %s354 = smul.addr %s353, 64
          %s355 = scalar_lea.vmem [#allocation4], %s354
          %s356 = smul.u32 8, %s39
          %s358 = ssub.s32 1024, 1024
          %359 = vsyncadd %s352, %s358
          %s360 = smul.addr %s38, 8
          %s361 = sadd.s32 %s356, %s360
          %s362 = smul.addr %s361, 128
          %s363 = scalar_lea.hbm %s1, %s362
          %s364 = sshll.u32 %s355, 4
          %s365 = int_to_ptr.vmem [resolvable:$true] %s364
          %370 = dma.hbm_to_vmem [thread:$0]  %s363, 1024, %s365, %s352, 128, 128, 8
        $region44: #{tpu_custom_call.1} parent=39 // pred_fallthru
          _
        // Predicated region
        $region45: #{tpu_custom_call.1} parent=39 // pred_check
          %p371 = pneg %p93
        $region46: #{tpu_custom_call.1} parent=39 // pred_check_branch
          %373 = sbr.rel (%p371) target = $region48
        $region47: #{tpu_custom_call.1} parent=39 // pred_region
          %s374 = sand.u32 %s31, 1
          %s375 = scalar_lea.sflag [#allocation8], %s374
          %s376 = sand.u32 %s83, 1
          %s377 = smul.addr %s376, 32
          %s378 = scalar_lea.vmem [#allocation7], %s377
          %s379 = smul.u32 8, %s39
          %s381 = ssub.s32 512, 512
          %382 = vsyncadd %s375, %s381
          %s383 = smul.addr %s38, 8
          %s384 = sadd.s32 %s379, %s383
          %s385 = smul.addr %s384, 64
          %s386 = scalar_lea.hbm %s2, %s385
          %s387 = sshll.u32 %s378, 4
          %s388 = int_to_ptr.vmem [resolvable:$true] %s387
          %393 = dma.hbm_to_vmem [thread:$0]  %s386, 512, %s388, %s375, 64, 64, 4
        $region48: #{tpu_custom_call.1} parent=39 // pred_fallthru
          _
        // Predicated region
        $region49: #{tpu_custom_call.1} parent=39 // pred_check
          %p394 = pneg %p121
        $region50: #{tpu_custom_call.1} parent=39 // pred_check_branch
          %396 = sbr.rel (%p394) target = $region52
        $region51: #{tpu_custom_call.1} parent=39 // pred_region
          %s397 = sand.u32 %s31, 1
          %s398 = scalar_lea.sflag [#allocation8], %s397
          %s399 = sand.u32 %s111, 1
          %s400 = smul.addr %s399, 32
          %s401 = scalar_lea.vmem [#allocation9], %s400
          %s402 = smul.u32 8, %s39
          %s404 = ssub.s32 512, 512
          %405 = vsyncadd %s398, %s404
          %s406 = smul.addr %s38, 8
          %s407 = sadd.s32 %s402, %s406
          %s408 = smul.addr %s407, 64
          %s409 = scalar_lea.hbm %s3, %s408
          %s410 = sshll.u32 %s401, 4
          %s411 = int_to_ptr.vmem [resolvable:$true] %s410
          %416 = dma.hbm_to_vmem [thread:$0]  %s409, 512, %s411, %s398, 64, 64, 4
        $region52: #{tpu_custom_call.1} parent=39 // pred_fallthru
          _
      $region40: #{tpu_custom_call.1} parent=5 // pred_fallthru
        _
      %p417 = scmp.le.s32.totalorder 1, %s31
      %p418 = scmp.lt.s32.totalorder %s31, 3
      %p419 = pnand %p417, %p418
      %p420 = pneg %p419
      // Predicated region
      $region53: #{tpu_custom_call.1} parent=5 // pred_check
        _
      $region54: #{tpu_custom_call.1} parent=5 // pred_check_branch
        %422 = sbr.rel (%p419) target = $region56
      $region55: #{tpu_custom_call.1} parent=5 // pred_region
        %s423 = ssub.s32 %s31, 1
        %s424 = sand.u32 %s58, 1
        %s425 = scalar_lea.sflag [#allocation5], %s424
        %s426 = sand.u32 %s58, 1
        %s427 = smul.addr %s426, 64
        %s428 = scalar_lea.vmem [#allocation4], %s427
        // Predicated region
        $region57: #{tpu_custom_call.1} parent=55 // pred_check
          %p429 = pneg %p71
        $region58: #{tpu_custom_call.1} parent=55 // pred_check_branch
          %431 = sbr.rel (%p429) target = $region60
        $region59: #{tpu_custom_call.1} parent=55 // pred_region
          %432 = dma.done %s425, 1024
        $region60: #{tpu_custom_call.1} parent=55 // pred_fallthru
          _
        %s433 = sand.u32 %s36, 1
        %s434 = scalar_lea.sflag [#allocation8], %s433
        %s435 = sand.u32 %s86, 1
        %s436 = smul.addr %s435, 32
        %s437 = scalar_lea.vmem [#allocation7], %s436
        // Predicated region
        $region61: #{tpu_custom_call.1} parent=55 // pred_check
          %p438 = pneg %p99
        $region62: #{tpu_custom_call.1} parent=55 // pred_check_branch
          %440 = sbr.rel (%p438) target = $region64
        $region63: #{tpu_custom_call.1} parent=55 // pred_region
          %441 = dma.done %s434, 512
        $region64: #{tpu_custom_call.1} parent=55 // pred_fallthru
          _
        %s442 = sand.u32 %s36, 1
        %s443 = scalar_lea.sflag [#allocation8], %s442
        %s444 = sand.u32 %s114, 1
        %s445 = smul.addr %s444, 32
        %s446 = scalar_lea.vmem [#allocation9], %s445
        // Predicated region
        $region65: #{tpu_custom_call.1} parent=55 // pred_check
          %p447 = pneg %p127
        $region66: #{tpu_custom_call.1} parent=55 // pred_check_branch
          %449 = sbr.rel (%p447) target = $region68
        $region67: #{tpu_custom_call.1} parent=55 // pred_region
          %450 = dma.done %s443, 512
        $region68: #{tpu_custom_call.1} parent=55 // pred_fallthru
          _
        // Predicated region
        $region69: #{tpu_custom_call.1} parent=55 // pred_check
          %p451 = pneg %p148
        $region70: #{tpu_custom_call.1} parent=55 // pred_check_branch
          %453 = sbr.rel (%p451) target = $region72
        $region71: #{tpu_custom_call.1} parent=55 // pred_region
          %454 = dma.done [#allocation11], 4096
        $region72: #{tpu_custom_call.1} parent=55 // pred_fallthru
          _
        // Predicated region
        $region73: #{tpu_custom_call.1} parent=55 // pred_check
          %p455 = pneg %p169
        $region74: #{tpu_custom_call.1} parent=55 // pred_check_branch
          %457 = sbr.rel (%p455) target = $region76
        $region75: #{tpu_custom_call.1} parent=55 // pred_region
          %458 = dma.done [#allocation11], 4096
        $region76: #{tpu_custom_call.1} parent=55 // pred_fallthru
          _
        // Predicated region
        $region77: #{tpu_custom_call.1} parent=55 // pred_check
          %p459 = pneg %p232
        $region78: #{tpu_custom_call.1} parent=55 // pred_check_branch
          %461 = sbr.rel (%p459) target = $region80
        $region79: #{tpu_custom_call.1} parent=55 // pred_region
          %462 = dma.done [#allocation14], 8192
        $region80: #{tpu_custom_call.1} parent=55 // pred_fallthru
          _
        %s463 = sand.u32 %s58, 1
        %s464 = scalar_lea.sflag [#allocation5], %s463
        %s465 = sand.u32 %s58, 1
        %s466 = smul.addr %s465, 64
        %s467 = scalar_lea.vmem [#allocation4], %s466
        %p468 = pneg %p71
        %p469 = pneg %p68
        %s470 = sand.u32 %s36, 1
        %s471 = scalar_lea.sflag [#allocation8], %s470
        %s472 = sand.u32 %s86, 1
        %s473 = smul.addr %s472, 32
        %s474 = scalar_lea.vmem [#allocation7], %s473
        %p475 = pneg %p99
        %p476 = pneg %p96
        %s477 = sand.u32 %s36, 1
        %s478 = scalar_lea.sflag [#allocation8], %s477
        %s479 = sand.u32 %s114, 1
        %s480 = smul.addr %s479, 32
        %s481 = scalar_lea.vmem [#allocation9], %s480
        %p482 = pneg %p127
        %p483 = pneg %p124
        %p484 = pneg %p148
        %p485 = pneg %p145
        %p486 = pneg %p169
        %p487 = pneg %p166
        %p488 = pneg %p190
        %p489 = pneg %p187
        %p490 = pneg %p211
        %p491 = pneg %p208
        %p492 = pneg %p232
        %p493 = pneg %p229
        %p494 = pneg %p253
        %p495 = pneg %p250
        %p496 = pneg %p281
        %p497 = pneg %p278
        %s498 = sand.u32 %s268, 1
        %s499 = scalar_lea.sflag [#allocation6], %s498
        %s500 = sand.u32 %s268, 1
        %s501 = smul.addr %s500, 64
        %s502 = scalar_lea.vmem [#allocation15], %s501
        %s503 = smul.u32 8, %s41
        %s504 = smul.u32 8, %s41
        %s505 = smul.u32 8, %s41
        %s506 = smul.u32 8, %s41
        %s508 = smul.u32 %s40, 128
        %s509 = sld [smem:[#allocation3 + %s508]]
        %s510 = sadd.s32 %s508, 1
        %s511 = sld [smem:[#allocation3 + %s510]]
        %s512 = sadd.s32 %s508, 2
        %s513 = sld [smem:[#allocation3 + %s512]]
        %v514 = vld [vmem:[%s428] sm:$0xff]
        %v515 = vld [vmem:[%s428 + $0x8] sm:$0xff]
        %v516 = vld [vmem:[%s428 + $0x10] sm:$0xff]
        %v517 = vld [vmem:[%s428 + $0x18] sm:$0xff]
        %v518 = vld [vmem:[%s428 + $0x20] sm:$0xff]
        %v519 = vld [vmem:[%s428 + $0x28] sm:$0xff]
        %v520 = vld [vmem:[%s428 + $0x30] sm:$0xff]
        %v521 = vld [vmem:[%s428 + $0x38] sm:$0xff]
        %v522 = vpack.c.bf16 %v515, %v514
        %v523 = vpack.c.bf16 %v517, %v516
        %v524 = vpack.c.bf16 %v519, %v518
        %v525 = vpack.c.bf16 %v521, %v520
        %v526 = vld [vmem:[#allocation10] sm:$0xff]
        %v527 = vld [vmem:[#allocation10 + $0x8] sm:$0xff]
        %v528 = vld [vmem:[#allocation10 + $0x10] sm:$0xff]
        %v529 = vld [vmem:[#allocation10 + $0x18] sm:$0xff]
        %v530 = vld [vmem:[#allocation10 + $0x20] sm:$0xff]
        %v531 = vld [vmem:[#allocation10 + $0x28] sm:$0xff]
        %v532 = vld [vmem:[#allocation10 + $0x30] sm:$0xff]
        %v533 = vld [vmem:[#allocation10 + $0x38] sm:$0xff]
        %v534 = vld [vmem:[#allocation10 + $0x40] sm:$0xff]
        %v535 = vld [vmem:[#allocation10 + $0x48] sm:$0xff]
        %v536 = vld [vmem:[#allocation10 + $0x50] sm:$0xff]
        %v537 = vld [vmem:[#allocation10 + $0x58] sm:$0xff]
        %v538 = vld [vmem:[#allocation10 + $0x60] sm:$0xff]
        %v539 = vld [vmem:[#allocation10 + $0x68] sm:$0xff]
        %v540 = vld [vmem:[#allocation10 + $0x70] sm:$0xff]
        %v541 = vld [vmem:[#allocation10 + $0x78] sm:$0xff]
        %v542 = vld [vmem:[#allocation10 + $0x80] sm:$0xff]
        %v543 = vld [vmem:[#allocation10 + $0x88] sm:$0xff]
        %v544 = vld [vmem:[#allocation10 + $0x90] sm:$0xff]
        %v545 = vld [vmem:[#allocation10 + $0x98] sm:$0xff]
        %v546 = vld [vmem:[#allocation10 + $0xa0] sm:$0xff]
        %v547 = vld [vmem:[#allocation10 + $0xa8] sm:$0xff]
        %v548 = vld [vmem:[#allocation10 + $0xb0] sm:$0xff]
        %v549 = vld [vmem:[#allocation10 + $0xb8] sm:$0xff]
        %v550 = vld [vmem:[#allocation10 + $0xc0] sm:$0xff]
        %v551 = vld [vmem:[#allocation10 + $0xc8] sm:$0xff]
        %v552 = vld [vmem:[#allocation10 + $0xd0] sm:$0xff]
        %v553 = vld [vmem:[#allocation10 + $0xd8] sm:$0xff]
        %v554 = vld [vmem:[#allocation10 + $0xe0] sm:$0xff]
        %v555 = vld [vmem:[#allocation10 + $0xe8] sm:$0xff]
        %v556 = vld [vmem:[#allocation10 + $0xf0] sm:$0xff]
        %v557 = vld [vmem:[#allocation10 + $0xf8] sm:$0xff]
        %v558 = vld [vmem:[%s437] sm:$0xf]
        %v559 = vld [vmem:[%s437 + $0x4] sm:$0xf]
        %v560 = vld [vmem:[%s437 + $0x8] sm:$0xf]
        %v561 = vld [vmem:[%s437 + $0xc] sm:$0xf]
        %v562 = vld [vmem:[%s437 + $0x10] sm:$0xf]
        %v563 = vld [vmem:[%s437 + $0x14] sm:$0xf]
        %v564 = vld [vmem:[%s437 + $0x18] sm:$0xf]
        %v565 = vld [vmem:[%s437 + $0x1c] sm:$0xf]
        %v566 = vld [vmem:[#allocation12] sm:$0xff]
        %v567 = vld [vmem:[#allocation12 + $0x8] sm:$0xff]
        %v568 = vld [vmem:[#allocation12 + $0x10] sm:$0xff]
        %v569 = vld [vmem:[#allocation12 + $0x18] sm:$0xff]
        %v570 = vld [vmem:[#allocation12 + $0x20] sm:$0xff]
        %v571 = vld [vmem:[#allocation12 + $0x28] sm:$0xff]
        %v572 = vld [vmem:[#allocation12 + $0x30] sm:$0xff]
        %v573 = vld [vmem:[#allocation12 + $0x38] sm:$0xff]
        %v574 = vld [vmem:[#allocation12 + $0x40] sm:$0xff]
        %v575 = vld [vmem:[#allocation12 + $0x48] sm:$0xff]
        %v576 = vld [vmem:[#allocation12 + $0x50] sm:$0xff]
        %v577 = vld [vmem:[#allocation12 + $0x58] sm:$0xff]
        %v578 = vld [vmem:[#allocation12 + $0x60] sm:$0xff]
        %v579 = vld [vmem:[#allocation12 + $0x68] sm:$0xff]
        %v580 = vld [vmem:[#allocation12 + $0x70] sm:$0xff]
        %v581 = vld [vmem:[#allocation12 + $0x78] sm:$0xff]
        %v582 = vld [vmem:[#allocation12 + $0x80] sm:$0xff]
        %v583 = vld [vmem:[#allocation12 + $0x88] sm:$0xff]
        %v584 = vld [vmem:[#allocation12 + $0x90] sm:$0xff]
        %v585 = vld [vmem:[#allocation12 + $0x98] sm:$0xff]
        %v586 = vld [vmem:[#allocation12 + $0xa0] sm:$0xff]
        %v587 = vld [vmem:[#allocation12 + $0xa8] sm:$0xff]
        %v588 = vld [vmem:[#allocation12 + $0xb0] sm:$0xff]
        %v589 = vld [vmem:[#allocation12 + $0xb8] sm:$0xff]
        %v590 = vld [vmem:[#allocation12 + $0xc0] sm:$0xff]
        %v591 = vld [vmem:[#allocation12 + $0xc8] sm:$0xff]
        %v592 = vld [vmem:[#allocation12 + $0xd0] sm:$0xff]
        %v593 = vld [vmem:[#allocation12 + $0xd8] sm:$0xff]
        %v594 = vld [vmem:[#allocation12 + $0xe0] sm:$0xff]
        %v595 = vld [vmem:[#allocation12 + $0xe8] sm:$0xff]
        %v596 = vld [vmem:[#allocation12 + $0xf0] sm:$0xff]
        %v597 = vld [vmem:[#allocation12 + $0xf8] sm:$0xff]
        %v606 = vunpack.c.l.b16 %v558
        %v607 = vunpack.c.l.b16 %v559
        %v608 = vunpack.c.l.b16 %v560
        %v609 = vunpack.c.l.b16 %v561
        %v610 = vunpack.c.l.b16 %v562
        %v611 = vunpack.c.l.b16 %v563
        %v612 = vunpack.c.l.b16 %v564
        %v613 = vunpack.c.l.b16 %v565
        %v614 = vpack.c.b16 %v607, %v606
        %v615 = vpack.c.b16 %v609, %v608
        %v616 = vpack.c.b16 %v611, %v610
        %v617 = vpack.c.b16 %v613, %v612
        %v654 = vunpack.c.l.b16 %v566
        %v655 = vunpack.c.h.b16 %v566
        %v656 = vunpack.c.l.b16 %v567
        %v657 = vunpack.c.h.b16 %v567
        %v658 = vunpack.c.l.b16 %v568
        %v659 = vunpack.c.h.b16 %v568
        %v660 = vunpack.c.l.b16 %v569
        %v661 = vunpack.c.h.b16 %v569
        %v662 = vunpack.c.l.b16 %v570
        %v663 = vunpack.c.h.b16 %v570
        %v664 = vunpack.c.l.b16 %v571
        %v665 = vunpack.c.h.b16 %v571
        %v666 = vunpack.c.l.b16 %v572
        %v667 = vunpack.c.h.b16 %v572
        %v668 = vunpack.c.l.b16 %v573
        %v669 = vunpack.c.h.b16 %v573
        %v670 = vunpack.c.l.b16 %v574
        %v671 = vunpack.c.h.b16 %v574
        %v672 = vunpack.c.l.b16 %v575
        %v673 = vunpack.c.h.b16 %v575
        %v674 = vunpack.c.l.b16 %v576
        %v675 = vunpack.c.h.b16 %v576
        %v676 = vunpack.c.l.b16 %v577
        %v677 = vunpack.c.h.b16 %v577
        %v678 = vunpack.c.l.b16 %v578
        %v679 = vunpack.c.h.b16 %v578
        %v680 = vunpack.c.l.b16 %v579
        %v681 = vunpack.c.h.b16 %v579
        %v682 = vunpack.c.l.b16 %v580
        %v683 = vunpack.c.h.b16 %v580
        %v684 = vunpack.c.l.b16 %v581
        %v685 = vunpack.c.h.b16 %v581
        %v686 = vunpack.c.l.b16 %v582
        %v687 = vunpack.c.h.b16 %v582
        %v688 = vunpack.c.l.b16 %v583
        %v689 = vunpack.c.h.b16 %v583
        %v690 = vunpack.c.l.b16 %v584
        %v691 = vunpack.c.h.b16 %v584
        %v692 = vunpack.c.l.b16 %v585
        %v693 = vunpack.c.h.b16 %v585
        %v694 = vunpack.c.l.b16 %v586
        %v695 = vunpack.c.h.b16 %v586
        %v696 = vunpack.c.l.b16 %v587
        %v697 = vunpack.c.h.b16 %v587
        %v698 = vunpack.c.l.b16 %v588
        %v699 = vunpack.c.h.b16 %v588
        %v700 = vunpack.c.l.b16 %v589
        %v701 = vunpack.c.h.b16 %v589
        %v702 = vunpack.c.l.b16 %v590
        %v703 = vunpack.c.h.b16 %v590
        %v704 = vunpack.c.l.b16 %v591
        %v705 = vunpack.c.h.b16 %v591
        %v706 = vunpack.c.l.b16 %v592
        %v707 = vunpack.c.h.b16 %v592
        %v708 = vunpack.c.l.b16 %v593
        %v709 = vunpack.c.h.b16 %v593
        %v710 = vunpack.c.l.b16 %v594
        %v711 = vunpack.c.h.b16 %v594
        %v712 = vunpack.c.l.b16 %v595
        %v713 = vunpack.c.h.b16 %v595
        %v714 = vunpack.c.l.b16 %v596
        %v715 = vunpack.c.h.b16 %v596
        %v716 = vunpack.c.l.b16 %v597
        %v717 = vunpack.c.h.b16 %v597
        %v718 = vpack.c.b16 %v658, %v654
        %v719 = vpack.c.b16 %v659, %v655
        %v720 = vpack.c.b16 %v660, %v656
        %v721 = vpack.c.b16 %v661, %v657
        %v722 = vpack.c.b16 %v666, %v662
        %v723 = vpack.c.b16 %v667, %v663
        %v724 = vpack.c.b16 %v668, %v664
        %v725 = vpack.c.b16 %v669, %v665
        %v726 = vpack.c.b16 %v674, %v670
        %v727 = vpack.c.b16 %v675, %v671
        %v728 = vpack.c.b16 %v676, %v672
        %v729 = vpack.c.b16 %v677, %v673
        %v730 = vpack.c.b16 %v682, %v678
        %v731 = vpack.c.b16 %v683, %v679
        %v732 = vpack.c.b16 %v684, %v680
        %v733 = vpack.c.b16 %v685, %v681
        %v734 = vpack.c.b16 %v690, %v686
        %v735 = vpack.c.b16 %v691, %v687
        %v736 = vpack.c.b16 %v692, %v688
        %v737 = vpack.c.b16 %v693, %v689
        %v738 = vpack.c.b16 %v698, %v694
        %v739 = vpack.c.b16 %v699, %v695
        %v740 = vpack.c.b16 %v700, %v696
        %v741 = vpack.c.b16 %v701, %v697
        %v742 = vpack.c.b16 %v706, %v702
        %v743 = vpack.c.b16 %v707, %v703
        %v744 = vpack.c.b16 %v708, %v704
        %v745 = vpack.c.b16 %v709, %v705
        %v746 = vpack.c.b16 %v714, %v710
        %v747 = vpack.c.b16 %v715, %v711
        %v748 = vpack.c.b16 %v716, %v712
        %v749 = vpack.c.b16 %v717, %v713
        %782 = vmatprep.subr.bf16.mxu0 %v719
        %783 = vmatpush1.bf16.msra.mxu0 %v718
        %784 = vmatprep.subr.bf16.mxu0 %v723
        %785 = vmatpush1.bf16.msra.mxu0 %v722
        %786 = vmatprep.subr.bf16.mxu0 %v727
        %787 = vmatpush1.bf16.msra.mxu0 %v726
        %788 = vmatprep.subr.bf16.mxu0 %v731
        %789 = vmatpush1.bf16.msra.mxu0 %v730
        %790 = vmatprep.subr.bf16.mxu0 %v735
        %791 = vmatpush1.bf16.msra.mxu0 %v734
        %792 = vmatprep.subr.bf16.mxu0 %v739
        %793 = vmatpush1.bf16.msra.mxu0 %v738
        %794 = vmatprep.subr.bf16.mxu0 %v743
        %795 = vmatpush1.bf16.msra.mxu0 %v742
        %796 = vmatprep.subr.bf16.mxu0 %v747
        %797 = vmatpush1.bf16.msra.mxu0 %v746
        %798 = vmatprep.subr.bf16.mxu0 0
        %799 = vmatpush1.bf16.msra.mxu0 0
        %800 = vmatprep.subr.bf16.mxu0 0
        %801 = vmatpush1.bf16.msra.mxu0 0
        %802 = vmatprep.subr.bf16.mxu0 0
        %803 = vmatpush1.bf16.msra.mxu0 0
        %804 = vmatprep.subr.bf16.mxu0 0
        %805 = vmatpush1.bf16.msra.mxu0 0
        %806 = vmatprep.subr.bf16.mxu0 0
        %807 = vmatpush1.bf16.msra.mxu0 0
        %808 = vmatprep.subr.bf16.mxu0 0
        %809 = vmatpush1.bf16.msra.mxu0 0
        %810 = vmatprep.subr.bf16.mxu0 0
        %811 = vmatpush1.bf16.msra.mxu0 0
        %812 = vmatprep.subr.bf16.mxu0 0
        %813 = vmatpush1.bf16.msra.mxu0 0
        %814 = vmatprep.mubr.bf16.mxu0 0
        %815 = vmatmul.mubr.bf16.gmra.mrb[0].mxu0 %v614
        %v816 = vpop.f32.mrb[0].mxu0
        %v817 = vadd.f32 0.0, %v816
        %v818 = vpop.f32.mrb[0].mxu0
        %v819 = vadd.f32 0.0, %v818
        %v820 = vpop.f32.mrb[0].mxu0
        %v821 = vadd.f32 0.0, %v820
        %v822 = vpop.f32.mrb[0].mxu0
        %v823 = vadd.f32 0.0, %v822
        %824 = vmatprep.mubr.bf16.mxu0 0
        %825 = vmatmul.mubr.bf16.gmra.mrb[0].mxu0 %v615
        %v826 = vpop.f32.mrb[0].mxu0
        %v827 = vadd.f32 0.0, %v826
        %v828 = vpop.f32.mrb[0].mxu0
        %v829 = vadd.f32 0.0, %v828
        %v830 = vpop.f32.mrb[0].mxu0
        %v831 = vadd.f32 0.0, %v830
        %v832 = vpop.f32.mrb[0].mxu0
        %v833 = vadd.f32 0.0, %v832
        %834 = vmatprep.mubr.bf16.mxu0 0
        %835 = vmatmul.mubr.bf16.gmra.mrb[0].mxu0 %v616
        %v836 = vpop.f32.mrb[0].mxu0
        %v837 = vadd.f32 0.0, %v836
        %v838 = vpop.f32.mrb[0].mxu0
        %v839 = vadd.f32 0.0, %v838
        %v840 = vpop.f32.mrb[0].mxu0
        %v841 = vadd.f32 0.0, %v840
        %v842 = vpop.f32.mrb[0].mxu0
        %v843 = vadd.f32 0.0, %v842
        %844 = vmatprep.mubr.bf16.mxu0 0
        %845 = vmatmul.mubr.bf16.gmra.mrb[0].mxu0 %v617
        %v846 = vpop.f32.mrb[0].mxu0
        %v847 = vadd.f32 0.0, %v846
        %v848 = vpop.f32.mrb[0].mxu0
        %v849 = vadd.f32 0.0, %v848
        %v850 = vpop.f32.mrb[0].mxu0
        %v851 = vadd.f32 0.0, %v850
        %v852 = vpop.f32.mrb[0].mxu0
        %v853 = vadd.f32 0.0, %v852
        %854 = vdwg.mxu0
        %855 = vmatprep.subr.bf16.mxu0 %v721
        %856 = vmatpush1.bf16.msra.mxu0 %v720
        %857 = vmatprep.subr.bf16.mxu0 %v725
        %858 = vmatpush1.bf16.msra.mxu0 %v724
        %859 = vmatprep.subr.bf16.mxu0 %v729
        %860 = vmatpush1.bf16.msra.mxu0 %v728
        %861 = vmatprep.subr.bf16.mxu0 %v733
        %862 = vmatpush1.bf16.msra.mxu0 %v732
        %863 = vmatprep.subr.bf16.mxu0 %v737
        %864 = vmatpush1.bf16.msra.mxu0 %v736
        %865 = vmatprep.subr.bf16.mxu0 %v741
        %866 = vmatpush1.bf16.msra.mxu0 %v740
        %867 = vmatprep.subr.bf16.mxu0 %v745
        %868 = vmatpush1.bf16.msra.mxu0 %v744
        %869 = vmatprep.subr.bf16.mxu0 %v749
        %870 = vmatpush1.bf16.msra.mxu0 %v748
        %871 = vmatprep.subr.bf16.mxu0 0
        %872 = vmatpush1.bf16.msra.mxu0 0
        %873 = vmatprep.subr.bf16.mxu0 0
        %874 = vmatpush1.bf16.msra.mxu0 0
        %875 = vmatprep.subr.bf16.mxu0 0
        %876 = vmatpush1.bf16.msra.mxu0 0
        %877 = vmatprep.subr.bf16.mxu0 0
        %878 = vmatpush1.bf16.msra.mxu0 0
        %879 = vmatprep.subr.bf16.mxu0 0
        %880 = vmatpush1.bf16.msra.mxu0 0
        %881 = vmatprep.subr.bf16.mxu0 0
        %882 = vmatpush1.bf16.msra.mxu0 0
        %883 = vmatprep.subr.bf16.mxu0 0
        %884 = vmatpush1.bf16.msra.mxu0 0
        %885 = vmatprep.subr.bf16.mxu0 0
        %886 = vmatpush1.bf16.msra.mxu0 0
        %887 = vmatprep.mubr.bf16.mxu0 0
        %888 = vmatmul.mubr.bf16.gmra.mrb[0].mxu0 %v614
        %v889 = vpop.f32.mrb[0].mxu0
        %v890 = vadd.f32 0.0, %v889
        %v891 = vpop.f32.mrb[0].mxu0
        %v892 = vadd.f32 0.0, %v891
        %v893 = vpop.f32.mrb[0].mxu0
        %v894 = vadd.f32 0.0, %v893
        %v895 = vpop.f32.mrb[0].mxu0
        %v896 = vadd.f32 0.0, %v895
        %897 = vmatprep.mubr.bf16.mxu0 0
        %898 = vmatmul.mubr.bf16.gmra.mrb[0].mxu0 %v615
        %v899 = vpop.f32.mrb[0].mxu0
        %v900 = vadd.f32 0.0, %v899
        %v901 = vpop.f32.mrb[0].mxu0
        %v902 = vadd.f32 0.0, %v901
        %v903 = vpop.f32.mrb[0].mxu0
        %v904 = vadd.f32 0.0, %v903
        %v905 = vpop.f32.mrb[0].mxu0
        %v906 = vadd.f32 0.0, %v905
        %907 = vmatprep.mubr.bf16.mxu0 0
        %908 = vmatmul.mubr.bf16.gmra.mrb[0].mxu0 %v616
        %v909 = vpop.f32.mrb[0].mxu0
        %v910 = vadd.f32 0.0, %v909
        %v911 = vpop.f32.mrb[0].mxu0
        %v912 = vadd.f32 0.0, %v911
        %v913 = vpop.f32.mrb[0].mxu0
        %v914 = vadd.f32 0.0, %v913
        %v915 = vpop.f32.mrb[0].mxu0
        %v916 = vadd.f32 0.0, %v915
        %917 = vmatprep.mubr.bf16.mxu0 0
        %918 = vmatmul.mubr.bf16.gmra.mrb[0].mxu0 %v617
        %v919 = vpop.f32.mrb[0].mxu0
        %v920 = vadd.f32 0.0, %v919
        %v921 = vpop.f32.mrb[0].mxu0
        %v922 = vadd.f32 0.0, %v921
        %v923 = vpop.f32.mrb[0].mxu0
        %v924 = vadd.f32 0.0, %v923
        %v925 = vpop.f32.mrb[0].mxu0
        %v926 = vadd.f32 0.0, %v925
        %927 = vdwg.mxu0
        %v960 = vunpack.c.l.b16 %v526
        %v961 = vunpack.c.h.b16 %v526
        %v962 = vunpack.c.l.b16 %v527
        %v963 = vunpack.c.h.b16 %v527
        %v964 = vunpack.c.l.b16 %v528
        %v965 = vunpack.c.h.b16 %v528
        %v966 = vunpack.c.l.b16 %v529
        %v967 = vunpack.c.h.b16 %v529
        %v968 = vunpack.c.l.b16 %v530
        %v969 = vunpack.c.h.b16 %v530
        %v970 = vunpack.c.l.b16 %v531
        %v971 = vunpack.c.h.b16 %v531
        %v972 = vunpack.c.l.b16 %v532
        %v973 = vunpack.c.h.b16 %v532
        %v974 = vunpack.c.l.b16 %v533
        %v975 = vunpack.c.h.b16 %v533
        %v976 = vunpack.c.l.b16 %v534
        %v977 = vunpack.c.h.b16 %v534
        %v978 = vunpack.c.l.b16 %v535
        %v979 = vunpack.c.h.b16 %v535
        %v980 = vunpack.c.l.b16 %v536
        %v981 = vunpack.c.h.b16 %v536
        %v982 = vunpack.c.l.b16 %v537
        %v983 = vunpack.c.h.b16 %v537
        %v984 = vunpack.c.l.b16 %v538
        %v985 = vunpack.c.h.b16 %v538
        %v986 = vunpack.c.l.b16 %v539
        %v987 = vunpack.c.h.b16 %v539
        %v988 = vunpack.c.l.b16 %v540
        %v989 = vunpack.c.h.b16 %v540
        %v990 = vunpack.c.l.b16 %v541
        %v991 = vunpack.c.h.b16 %v541
        %v992 = vunpack.c.l.b16 %v542
        %v993 = vunpack.c.h.b16 %v542
        %v994 = vunpack.c.l.b16 %v543
        %v995 = vunpack.c.h.b16 %v543
        %v996 = vunpack.c.l.b16 %v544
        %v997 = vunpack.c.h.b16 %v544
        %v998 = vunpack.c.l.b16 %v545
        %v999 = vunpack.c.h.b16 %v545
        %v1000 = vunpack.c.l.b16 %v546
        %v1001 = vunpack.c.h.b16 %v546
        %v1002 = vunpack.c.l.b16 %v547
        %v1003 = vunpack.c.h.b16 %v547
        %v1004 = vunpack.c.l.b16 %v548
        %v1005 = vunpack.c.h.b16 %v548
        %v1006 = vunpack.c.l.b16 %v549
        %v1007 = vunpack.c.h.b16 %v549
        %v1008 = vunpack.c.l.b16 %v550
        %v1009 = vunpack.c.h.b16 %v550
        %v1010 = vunpack.c.l.b16 %v551
        %v1011 = vunpack.c.h.b16 %v551
        %v1012 = vunpack.c.l.b16 %v552
        %v1013 = vunpack.c.h.b16 %v552
        %v1014 = vunpack.c.l.b16 %v553
        %v1015 = vunpack.c.h.b16 %v553
        %v1016 = vunpack.c.l.b16 %v554
        %v1017 = vunpack.c.h.b16 %v554
        %v1018 = vunpack.c.l.b16 %v555
        %v1019 = vunpack.c.h.b16 %v555
        %v1020 = vunpack.c.l.b16 %v556
        %v1021 = vunpack.c.h.b16 %v556
        %v1022 = vunpack.c.l.b16 %v557
        %v1023 = vunpack.c.h.b16 %v557
        %v1024 = vpack.c.b16 %v964, %v960
        %v1025 = vpack.c.b16 %v965, %v961
        %v1026 = vpack.c.b16 %v966, %v962
        %v1027 = vpack.c.b16 %v967, %v963
        %v1028 = vpack.c.b16 %v972, %v968
        %v1029 = vpack.c.b16 %v973, %v969
        %v1030 = vpack.c.b16 %v974, %v970
        %v1031 = vpack.c.b16 %v975, %v971
        %v1032 = vpack.c.b16 %v980, %v976
        %v1033 = vpack.c.b16 %v981, %v977
        %v1034 = vpack.c.b16 %v982, %v978
        %v1035 = vpack.c.b16 %v983, %v979
        %v1036 = vpack.c.b16 %v988, %v984
        %v1037 = vpack.c.b16 %v989, %v985
        %v1038 = vpack.c.b16 %v990, %v986
        %v1039 = vpack.c.b16 %v991, %v987
        %v1040 = vpack.c.b16 %v996, %v992
        %v1041 = vpack.c.b16 %v997, %v993
        %v1042 = vpack.c.b16 %v998, %v994
        %v1043 = vpack.c.b16 %v999, %v995
        %v1044 = vpack.c.b16 %v1004, %v1000
        %v1045 = vpack.c.b16 %v1005, %v1001
        %v1046 = vpack.c.b16 %v1006, %v1002
        %v1047 = vpack.c.b16 %v1007, %v1003
        %v1048 = vpack.c.b16 %v1012, %v1008
        %v1049 = vpack.c.b16 %v1013, %v1009
        %v1050 = vpack.c.b16 %v1014, %v1010
        %v1051 = vpack.c.b16 %v1015, %v1011
        %v1052 = vpack.c.b16 %v1020, %v1016
        %v1053 = vpack.c.b16 %v1021, %v1017
        %v1054 = vpack.c.b16 %v1022, %v1018
        %v1055 = vpack.c.b16 %v1023, %v1019
        %1088 = vmatprep.subr.bf16.mxu0 %v1025
        %1089 = vmatpush1.bf16.msra.mxu0 %v1024
        %1090 = vmatprep.subr.bf16.mxu0 %v1029
        %1091 = vmatpush1.bf16.msra.mxu0 %v1028
        %1092 = vmatprep.subr.bf16.mxu0 %v1033
        %1093 = vmatpush1.bf16.msra.mxu0 %v1032
        %1094 = vmatprep.subr.bf16.mxu0 %v1037
        %1095 = vmatpush1.bf16.msra.mxu0 %v1036
        %1096 = vmatprep.subr.bf16.mxu0 %v1041
        %1097 = vmatpush1.bf16.msra.mxu0 %v1040
        %1098 = vmatprep.subr.bf16.mxu0 %v1045
        %1099 = vmatpush1.bf16.msra.mxu0 %v1044
        %1100 = vmatprep.subr.bf16.mxu0 %v1049
        %1101 = vmatpush1.bf16.msra.mxu0 %v1048
        %1102 = vmatprep.subr.bf16.mxu0 %v1053
        %1103 = vmatpush1.bf16.msra.mxu0 %v1052
        %1104 = vmatprep.subr.bf16.mxu0 0
        %1105 = vmatpush1.bf16.msra.mxu0 0
        %1106 = vmatprep.subr.bf16.mxu0 0
        %1107 = vmatpush1.bf16.msra.mxu0 0
        %1108 = vmatprep.subr.bf16.mxu0 0
        %1109 = vmatpush1.bf16.msra.mxu0 0
        %1110 = vmatprep.subr.bf16.mxu0 0
        %1111 = vmatpush1.bf16.msra.mxu0 0
        %1112 = vmatprep.subr.bf16.mxu0 0
        %1113 = vmatpush1.bf16.msra.mxu0 0
        %1114 = vmatprep.subr.bf16.mxu0 0
        %1115 = vmatpush1.bf16.msra.mxu0 0
        %1116 = vmatprep.subr.bf16.mxu0 0
        %1117 = vmatpush1.bf16.msra.mxu0 0
        %1118 = vmatprep.subr.bf16.mxu0 0
        %1119 = vmatpush1.bf16.msra.mxu0 0
        %1120 = vmatprep.mubr.bf16.mxu0 0
        %1121 = vmatmul.mubr.bf16.gmra.mrb[0].mxu0 %v522
        %v1122 = vpop.f32.mrb[0].mxu0
        %v1123 = vadd.f32 %v817, %v1122
        %v1124 = vpop.f32.mrb[0].mxu0
        %v1125 = vadd.f32 %v819, %v1124
        %v1126 = vpop.f32.mrb[0].mxu0
        %v1127 = vadd.f32 %v821, %v1126
        %v1128 = vpop.f32.mrb[0].mxu0
        %v1129 = vadd.f32 %v823, %v1128
        %1130 = vmatprep.mubr.bf16.mxu0 0
        %1131 = vmatmul.mubr.bf16.gmra.mrb[0].mxu0 %v523
        %v1132 = vpop.f32.mrb[0].mxu0
        %v1133 = vadd.f32 %v827, %v1132
        %v1134 = vpop.f32.mrb[0].mxu0
        %v1135 = vadd.f32 %v829, %v1134
        %v1136 = vpop.f32.mrb[0].mxu0
        %v1137 = vadd.f32 %v831, %v1136
        %v1138 = vpop.f32.mrb[0].mxu0
        %v1139 = vadd.f32 %v833, %v1138
        %1140 = vmatprep.mubr.bf16.mxu0 0
        %1141 = vmatmul.mubr.bf16.gmra.mrb[0].mxu0 %v524
        %v1142 = vpop.f32.mrb[0].mxu0
        %v1143 = vadd.f32 %v837, %v1142
        %v1144 = vpop.f32.mrb[0].mxu0
        %v1145 = vadd.f32 %v839, %v1144
        %v1146 = vpop.f32.mrb[0].mxu0
        %v1147 = vadd.f32 %v841, %v1146
        %v1148 = vpop.f32.mrb[0].mxu0
        %v1149 = vadd.f32 %v843, %v1148
        %1150 = vmatprep.mubr.bf16.mxu0 0
        %1151 = vmatmul.mubr.bf16.gmra.mrb[0].mxu0 %v525
        %v1152 = vpop.f32.mrb[0].mxu0
        %v1153 = vadd.f32 %v847, %v1152
        %v1154 = vpop.f32.mrb[0].mxu0
        %v1155 = vadd.f32 %v849, %v1154
        %v1156 = vpop.f32.mrb[0].mxu0
        %v1157 = vadd.f32 %v851, %v1156
        %v1158 = vpop.f32.mrb[0].mxu0
        %v1159 = vadd.f32 %v853, %v1158
        %1160 = vdwg.mxu0
        %1161 = vmatprep.subr.bf16.mxu0 %v1027
        %1162 = vmatpush1.bf16.msra.mxu0 %v1026
        %1163 = vmatprep.subr.bf16.mxu0 %v1031
        %1164 = vmatpush1.bf16.msra.mxu0 %v1030
        %1165 = vmatprep.subr.bf16.mxu0 %v1035
        %1166 = vmatpush1.bf16.msra.mxu0 %v1034
        %1167 = vmatprep.subr.bf16.mxu0 %v1039
        %1168 = vmatpush1.bf16.msra.mxu0 %v1038
        %1169 = vmatprep.subr.bf16.mxu0 %v1043
        %1170 = vmatpush1.bf16.msra.mxu0 %v1042
        %1171 = vmatprep.subr.bf16.mxu0 %v1047
        %1172 = vmatpush1.bf16.msra.mxu0 %v1046
        %1173 = vmatprep.subr.bf16.mxu0 %v1051
        %1174 = vmatpush1.bf16.msra.mxu0 %v1050
        %1175 = vmatprep.subr.bf16.mxu0 %v1055
        %1176 = vmatpush1.bf16.msra.mxu0 %v1054
        %1177 = vmatprep.subr.bf16.mxu0 0
        %1178 = vmatpush1.bf16.msra.mxu0 0
        %1179 = vmatprep.subr.bf16.mxu0 0
        %1180 = vmatpush1.bf16.msra.mxu0 0
        %1181 = vmatprep.subr.bf16.mxu0 0
        %1182 = vmatpush1.bf16.msra.mxu0 0
        %1183 = vmatprep.subr.bf16.mxu0 0
        %1184 = vmatpush1.bf16.msra.mxu0 0
        %1185 = vmatprep.subr.bf16.mxu0 0
        %1186 = vmatpush1.bf16.msra.mxu0 0
        %1187 = vmatprep.subr.bf16.mxu0 0
        %1188 = vmatpush1.bf16.msra.mxu0 0
        %1189 = vmatprep.subr.bf16.mxu0 0
        %1190 = vmatpush1.bf16.msra.mxu0 0
        %1191 = vmatprep.subr.bf16.mxu0 0
        %1192 = vmatpush1.bf16.msra.mxu0 0
        %1193 = vmatprep.mubr.bf16.mxu0 0
        %1194 = vmatmul.mubr.bf16.gmra.mrb[0].mxu0 %v522
        %v1195 = vpop.f32.mrb[0].mxu0
        %v1196 = vadd.f32 %v890, %v1195
        %v1197 = vpop.f32.mrb[0].mxu0
        %v1198 = vadd.f32 %v892, %v1197
        %v1199 = vpop.f32.mrb[0].mxu0
        %v1200 = vadd.f32 %v894, %v1199
        %v1201 = vpop.f32.mrb[0].mxu0
        %v1202 = vadd.f32 %v896, %v1201
        %1203 = vmatprep.mubr.bf16.mxu0 0
        %1204 = vmatmul.mubr.bf16.gmra.mrb[0].mxu0 %v523
        %v1205 = vpop.f32.mrb[0].mxu0
        %v1206 = vadd.f32 %v900, %v1205
        %v1207 = vpop.f32.mrb[0].mxu0
        %v1208 = vadd.f32 %v902, %v1207
        %v1209 = vpop.f32.mrb[0].mxu0
        %v1210 = vadd.f32 %v904, %v1209
        %v1211 = vpop.f32.mrb[0].mxu0
        %v1212 = vadd.f32 %v906, %v1211
        %1213 = vmatprep.mubr.bf16.mxu0 0
        %1214 = vmatmul.mubr.bf16.gmra.mrb[0].mxu0 %v524
        %v1215 = vpop.f32.mrb[0].mxu0
        %v1216 = vadd.f32 %v910, %v1215
        %v1217 = vpop.f32.mrb[0].mxu0
        %v1218 = vadd.f32 %v912, %v1217
        %v1219 = vpop.f32.mrb[0].mxu0
        %v1220 = vadd.f32 %v914, %v1219
        %v1221 = vpop.f32.mrb[0].mxu0
        %v1222 = vadd.f32 %v916, %v1221
        %1223 = vmatprep.mubr.bf16.mxu0 0
        %1224 = vmatmul.mubr.bf16.gmra.mrb[0].mxu0 %v525
        %v1225 = vpop.f32.mrb[0].mxu0
        %v1226 = vadd.f32 %v920, %v1225
        %v1227 = vpop.f32.mrb[0].mxu0
        %v1228 = vadd.f32 %v922, %v1227
        %v1229 = vpop.f32.mrb[0].mxu0
        %v1230 = vadd.f32 %v924, %v1229
        %v1231 = vpop.f32.mrb[0].mxu0
        %v1232 = vadd.f32 %v926, %v1231
        %1233 = vdwg.mxu0
        %v1234 = vld [vmem:[%s6] sm:$0xf]
        %v1236 = vlaneseq
        %v1237 = vshrl.u32 %v1236, 7
        %v1238 = vsub.s32 0, %v1237
        %v1239 = vrot.slane %v1234, %v1238
        %v1240 = vlaneseq
        %v1241 = vshrl.u32 %v1240, 7
        %v1242 = vsub.s32 1, %v1241
        %v1243 = vrot.slane %v1234, %v1242
        %v1244 = vlaneseq
        %v1245 = vshrl.u32 %v1244, 7
        %v1246 = vsub.s32 2, %v1245
        %v1247 = vrot.slane %v1234, %v1246
        %v1248 = vlaneseq
        %v1249 = vshrl.u32 %v1248, 7
        %v1250 = vsub.s32 3, %v1249
        %v1251 = vrot.slane %v1234, %v1250
        %v1256 = vadd.f32 %v1123, %v1239
        %v1257 = vadd.f32 %v1125, %v1243
        %v1258 = vadd.f32 %v1196, %v1247
        %v1259 = vadd.f32 %v1198, %v1251
        %v1260 = vadd.f32 %v1127, %v1239
        %v1261 = vadd.f32 %v1129, %v1243
        %v1262 = vadd.f32 %v1200, %v1247
        %v1263 = vadd.f32 %v1202, %v1251
        %v1264 = vadd.f32 %v1133, %v1239
        %v1265 = vadd.f32 %v1135, %v1243
        %v1266 = vadd.f32 %v1206, %v1247
        %v1267 = vadd.f32 %v1208, %v1251
        %v1268 = vadd.f32 %v1137, %v1239
        %v1269 = vadd.f32 %v1139, %v1243
        %v1270 = vadd.f32 %v1210, %v1247
        %v1271 = vadd.f32 %v1212, %v1251
        %v1272 = vadd.f32 %v1143, %v1239
        %v1273 = vadd.f32 %v1145, %v1243
        %v1274 = vadd.f32 %v1216, %v1247
        %v1275 = vadd.f32 %v1218, %v1251
        %v1276 = vadd.f32 %v1147, %v1239
        %v1277 = vadd.f32 %v1149, %v1243
        %v1278 = vadd.f32 %v1220, %v1247
        %v1279 = vadd.f32 %v1222, %v1251
        %v1280 = vadd.f32 %v1153, %v1239
        %v1281 = vadd.f32 %v1155, %v1243
        %v1282 = vadd.f32 %v1226, %v1247
        %v1283 = vadd.f32 %v1228, %v1251
        %v1284 = vadd.f32 %v1157, %v1239
        %v1285 = vadd.f32 %v1159, %v1243
        %v1286 = vadd.f32 %v1230, %v1247
        %v1287 = vadd.f32 %v1232, %v1251
        %v1288 = vld [vmem:[%s7] sm:$0xf]
        %v1289 = vstv %s511
        %v1290 = vmul.f32 %v1289, %v1288
        %v1292 = vlaneseq
        %v1293 = vshrl.u32 %v1292, 7
        %v1294 = vsub.s32 0, %v1293
        %v1295 = vrot.slane %v1290, %v1294
        %v1296 = vlaneseq
        %v1297 = vshrl.u32 %v1296, 7
        %v1298 = vsub.s32 1, %v1297
        %v1299 = vrot.slane %v1290, %v1298
        %v1300 = vlaneseq
        %v1301 = vshrl.u32 %v1300, 7
        %v1302 = vsub.s32 2, %v1301
        %v1303 = vrot.slane %v1290, %v1302
        %v1304 = vlaneseq
        %v1305 = vshrl.u32 %v1304, 7
        %v1306 = vsub.s32 3, %v1305
        %v1307 = vrot.slane %v1290, %v1306
        %v1312 = vadd.f32 %v1256, %v1295
        %v1313 = vadd.f32 %v1257, %v1299
        %v1314 = vadd.f32 %v1258, %v1303
        %v1315 = vadd.f32 %v1259, %v1307
        %v1316 = vadd.f32 %v1260, %v1295
        %v1317 = vadd.f32 %v1261, %v1299
        %v1318 = vadd.f32 %v1262, %v1303
        %v1319 = vadd.f32 %v1263, %v1307
        %v1320 = vadd.f32 %v1264, %v1295
        %v1321 = vadd.f32 %v1265, %v1299
        %v1322 = vadd.f32 %v1266, %v1303
        %v1323 = vadd.f32 %v1267, %v1307
        %v1324 = vadd.f32 %v1268, %v1295
        %v1325 = vadd.f32 %v1269, %v1299
        %v1326 = vadd.f32 %v1270, %v1303
        %v1327 = vadd.f32 %v1271, %v1307
        %v1328 = vadd.f32 %v1272, %v1295
        %v1329 = vadd.f32 %v1273, %v1299
        %v1330 = vadd.f32 %v1274, %v1303
        %v1331 = vadd.f32 %v1275, %v1307
        %v1332 = vadd.f32 %v1276, %v1295
        %v1333 = vadd.f32 %v1277, %v1299
        %v1334 = vadd.f32 %v1278, %v1303
        %v1335 = vadd.f32 %v1279, %v1307
        %v1336 = vadd.f32 %v1280, %v1295
        %v1337 = vadd.f32 %v1281, %v1299
        %v1338 = vadd.f32 %v1282, %v1303
        %v1339 = vadd.f32 %v1283, %v1307
        %v1340 = vadd.f32 %v1284, %v1295
        %v1341 = vadd.f32 %v1285, %v1299
        %v1342 = vadd.f32 %v1286, %v1303
        %v1343 = vadd.f32 %v1287, %v1307
        %v1344 = vtanh.pop %v1312
        %v1345 = vtanh.pop %v1313
        %v1346 = vtanh.pop %v1314
        %v1347 = vtanh.pop %v1315
        %v1348 = vtanh.pop %v1316
        %v1349 = vtanh.pop %v1317
        %v1350 = vtanh.pop %v1318
        %v1351 = vtanh.pop %v1319
        %v1352 = vtanh.pop %v1320
        %v1353 = vtanh.pop %v1321
        %v1354 = vtanh.pop %v1322
        %v1355 = vtanh.pop %v1323
        %v1356 = vtanh.pop %v1324
        %v1357 = vtanh.pop %v1325
        %v1358 = vtanh.pop %v1326
        %v1359 = vtanh.pop %v1327
        %v1360 = vtanh.pop %v1328
        %v1361 = vtanh.pop %v1329
        %v1362 = vtanh.pop %v1330
        %v1363 = vtanh.pop %v1331
        %v1364 = vtanh.pop %v1332
        %v1365 = vtanh.pop %v1333
        %v1366 = vtanh.pop %v1334
        %v1367 = vtanh.pop %v1335
        %v1368 = vtanh.pop %v1336
        %v1369 = vtanh.pop %v1337
        %v1370 = vtanh.pop %v1338
        %v1371 = vtanh.pop %v1339
        %v1372 = vtanh.pop %v1340
        %v1373 = vtanh.pop %v1341
        %v1374 = vtanh.pop %v1342
        %v1375 = vtanh.pop %v1343
        %v1376 = vld [vmem:[#allocation13] sm:$0xff]
        %v1377 = vld [vmem:[#allocation13 + $0x8] sm:$0xff]
        %v1378 = vld [vmem:[#allocation13 + $0x10] sm:$0xff]
        %v1379 = vld [vmem:[#allocation13 + $0x18] sm:$0xff]
        %v1380 = vld [vmem:[#allocation13 + $0x20] sm:$0xff]
        %v1381 = vld [vmem:[#allocation13 + $0x28] sm:$0xff]
        %v1382 = vld [vmem:[#allocation13 + $0x30] sm:$0xff]
        %v1383 = vld [vmem:[#allocation13 + $0x38] sm:$0xff]
        %v1384 = vld [vmem:[#allocation13 + $0x40] sm:$0xff]
        %v1385 = vld [vmem:[#allocation13 + $0x48] sm:$0xff]
        %v1386 = vld [vmem:[#allocation13 + $0x50] sm:$0xff]
        %v1387 = vld [vmem:[#allocation13 + $0x58] sm:$0xff]
        %v1388 = vld [vmem:[#allocation13 + $0x60] sm:$0xff]
        %v1389 = vld [vmem:[#allocation13 + $0x68] sm:$0xff]
        %v1390 = vld [vmem:[#allocation13 + $0x70] sm:$0xff]
        %v1391 = vld [vmem:[#allocation13 + $0x78] sm:$0xff]
        %v1392 = vld [vmem:[#allocation13 + $0x80] sm:$0xff]
        %v1393 = vld [vmem:[#allocation13 + $0x88] sm:$0xff]
        %v1394 = vld [vmem:[#allocation13 + $0x90] sm:$0xff]
        %v1395 = vld [vmem:[#allocation13 + $0x98] sm:$0xff]
        %v1396 = vld [vmem:[#allocation13 + $0xa0] sm:$0xff]
        %v1397 = vld [vmem:[#allocation13 + $0xa8] sm:$0xff]
        %v1398 = vld [vmem:[#allocation13 + $0xb0] sm:$0xff]
        %v1399 = vld [vmem:[#allocation13 + $0xb8] sm:$0xff]
        %v1400 = vld [vmem:[#allocation13 + $0xc0] sm:$0xff]
        %v1401 = vld [vmem:[#allocation13 + $0xc8] sm:$0xff]
        %v1402 = vld [vmem:[#allocation13 + $0xd0] sm:$0xff]
        %v1403 = vld [vmem:[#allocation13 + $0xd8] sm:$0xff]
        %v1404 = vld [vmem:[#allocation13 + $0xe0] sm:$0xff]
        %v1405 = vld [vmem:[#allocation13 + $0xe8] sm:$0xff]
        %v1406 = vld [vmem:[#allocation13 + $0xf0] sm:$0xff]
        %v1407 = vld [vmem:[#allocation13 + $0xf8] sm:$0xff]
        %v1408 = vld [vmem:[#allocation13 + $0x100] sm:$0xff]
        %v1409 = vld [vmem:[#allocation13 + $0x108] sm:$0xff]
        %v1410 = vld [vmem:[#allocation13 + $0x110] sm:$0xff]
        %v1411 = vld [vmem:[#allocation13 + $0x118] sm:$0xff]
        %v1412 = vld [vmem:[#allocation13 + $0x120] sm:$0xff]
        %v1413 = vld [vmem:[#allocation13 + $0x128] sm:$0xff]
        %v1414 = vld [vmem:[#allocation13 + $0x130] sm:$0xff]
        %v1415 = vld [vmem:[#allocation13 + $0x138] sm:$0xff]
        %v1416 = vld [vmem:[#allocation13 + $0x140] sm:$0xff]
        %v1417 = vld [vmem:[#allocation13 + $0x148] sm:$0xff]
        %v1418 = vld [vmem:[#allocation13 + $0x150] sm:$0xff]
        %v1419 = vld [vmem:[#allocation13 + $0x158] sm:$0xff]
        %v1420 = vld [vmem:[#allocation13 + $0x160] sm:$0xff]
        %v1421 = vld [vmem:[#allocation13 + $0x168] sm:$0xff]
        %v1422 = vld [vmem:[#allocation13 + $0x170] sm:$0xff]
        %v1423 = vld [vmem:[#allocation13 + $0x178] sm:$0xff]
        %v1424 = vld [vmem:[#allocation13 + $0x180] sm:$0xff]
        %v1425 = vld [vmem:[#allocation13 + $0x188] sm:$0xff]
        %v1426 = vld [vmem:[#allocation13 + $0x190] sm:$0xff]
        %v1427 = vld [vmem:[#allocation13 + $0x198] sm:$0xff]
        %v1428 = vld [vmem:[#allocation13 + $0x1a0] sm:$0xff]
        %v1429 = vld [vmem:[#allocation13 + $0x1a8] sm:$0xff]
        %v1430 = vld [vmem:[#allocation13 + $0x1b0] sm:$0xff]
        %v1431 = vld [vmem:[#allocation13 + $0x1b8] sm:$0xff]
        %v1432 = vld [vmem:[#allocation13 + $0x1c0] sm:$0xff]
        %v1433 = vld [vmem:[#allocation13 + $0x1c8] sm:$0xff]
        %v1434 = vld [vmem:[#allocation13 + $0x1d0] sm:$0xff]
        %v1435 = vld [vmem:[#allocation13 + $0x1d8] sm:$0xff]
        %v1436 = vld [vmem:[#allocation13 + $0x1e0] sm:$0xff]
        %v1437 = vld [vmem:[#allocation13 + $0x1e8] sm:$0xff]
        %v1438 = vld [vmem:[#allocation13 + $0x1f0] sm:$0xff]
        %v1439 = vld [vmem:[#allocation13 + $0x1f8] sm:$0xff]
        %v1440 = vld [vmem:[%s9] sm:$0x1]
        %v1442 = vlaneseq
        %v1443 = vshrl.u32 %v1442, 7
        %v1444 = vsub.s32 0, %v1443
        %v1445 = vrot.slane %v1440, %v1444
        %1447 = vmatprep.subr.mxu0 0.0
        %1448 = vmatpush1.msra.mxu0 %v1376
        %1449 = vmatprep.subr.mxu0 0.0
        %1450 = vmatpush1.msra.mxu0 %v1377
        %1451 = vmatprep.subr.mxu0 0.0
        %1452 = vmatpush1.msra.mxu0 %v1378
        %1453 = vmatprep.subr.mxu0 0.0
        %1454 = vmatpush1.msra.mxu0 %v1379
        %1455 = vmatprep.subr.mxu0 0.0
        %1456 = vmatpush1.msra.mxu0 %v1380
        %1457 = vmatprep.subr.mxu0 0.0
        %1458 = vmatpush1.msra.mxu0 %v1381
        %1459 = vmatprep.subr.mxu0 0.0
        %1460 = vmatpush1.msra.mxu0 %v1382
        %1461 = vmatprep.subr.mxu0 0.0
        %1462 = vmatpush1.msra.mxu0 %v1383
        %1463 = vmatprep.subr.mxu0 0.0
        %1464 = vmatpush1.msra.mxu0 %v1384
        %1465 = vmatprep.subr.mxu0 0.0
        %1466 = vmatpush1.msra.mxu0 %v1385
        %1467 = vmatprep.subr.mxu0 0.0
        %1468 = vmatpush1.msra.mxu0 %v1386
        %1469 = vmatprep.subr.mxu0 0.0
        %1470 = vmatpush1.msra.mxu0 %v1387
        %1471 = vmatprep.subr.mxu0 0.0
        %1472 = vmatpush1.msra.mxu0 %v1388
        %1473 = vmatprep.subr.mxu0 0.0
        %1474 = vmatpush1.msra.mxu0 %v1389
        %1475 = vmatprep.subr.mxu0 0.0
        %1476 = vmatpush1.msra.mxu0 %v1390
        %1477 = vmatprep.subr.mxu0 0.0
        %1478 = vmatpush1.msra.mxu0 %v1391
        %1479 = vmatprep.subr.mxu0 0.0
        %1480 = vmatpush1.msra.mxu0 %v1392
        %1481 = vmatprep.subr.mxu0 0.0
        %1482 = vmatpush1.msra.mxu0 %v1393
        %1483 = vmatprep.subr.mxu0 0.0
        %1484 = vmatpush1.msra.mxu0 %v1394
        %1485 = vmatprep.subr.mxu0 0.0
        %1486 = vmatpush1.msra.mxu0 %v1395
        %1487 = vmatprep.subr.mxu0 0.0
        %1488 = vmatpush1.msra.mxu0 %v1396
        %1489 = vmatprep.subr.mxu0 0.0
        %1490 = vmatpush1.msra.mxu0 %v1397
        %1491 = vmatprep.subr.mxu0 0.0
        %1492 = vmatpush1.msra.mxu0 %v1398
        %1493 = vmatprep.subr.mxu0 0.0
        %1494 = vmatpush1.msra.mxu0 %v1399
        %1495 = vmatprep.subr.mxu0 0.0
        %1496 = vmatpush1.msra.mxu0 %v1400
        %1497 = vmatprep.subr.mxu0 0.0
        %1498 = vmatpush1.msra.mxu0 %v1401
        %1499 = vmatprep.subr.mxu0 0.0
        %1500 = vmatpush1.msra.mxu0 %v1402
        %1501 = vmatprep.subr.mxu0 0.0
        %1502 = vmatpush1.msra.mxu0 %v1403
        %1503 = vmatprep.subr.mxu0 0.0
        %1504 = vmatpush1.msra.mxu0 %v1404
        %1505 = vmatprep.subr.mxu0 0.0
        %1506 = vmatpush1.msra.mxu0 %v1405
        %1507 = vmatprep.subr.mxu0 0.0
        %1508 = vmatpush1.msra.mxu0 %v1406
        %1509 = vmatprep.subr.mxu0 0.0
        %1510 = vmatpush1.msra.mxu0 %v1407
        %1511 = vmatprep.mubr.f32.mxu0 %v1345
        %1512 = vmatmul.mubr.f32.gmra.mrb[0].mxu0 %v1344
        %v1513 = vpop.f32.mrb[0].mxu0
        %v1514 = vadd.f32 %v1445, %v1513
        %v1515 = vpop.f32.mrb[0].mxu0
        %1516 = vmatprep.mubr.f32.mxu0 %v1349
        %1517 = vmatmul.mubr.f32.gmra.mrb[0].mxu0 %v1348
        %v1518 = vpop.f32.mrb[0].mxu0
        %v1519 = vadd.f32 %v1445, %v1518
        %v1520 = vpop.f32.mrb[0].mxu0
        %1521 = vmatprep.mubr.f32.mxu0 %v1353
        %1522 = vmatmul.mubr.f32.gmra.mrb[0].mxu0 %v1352
        %v1523 = vpop.f32.mrb[0].mxu0
        %v1524 = vadd.f32 %v1445, %v1523
        %v1525 = vpop.f32.mrb[0].mxu0
        %1526 = vmatprep.mubr.f32.mxu0 %v1357
        %1527 = vmatmul.mubr.f32.gmra.mrb[0].mxu0 %v1356
        %v1528 = vpop.f32.mrb[0].mxu0
        %v1529 = vadd.f32 %v1445, %v1528
        %v1530 = vpop.f32.mrb[0].mxu0
        %1531 = vmatprep.mubr.f32.mxu0 %v1361
        %1532 = vmatmul.mubr.f32.gmra.mrb[0].mxu0 %v1360
        %v1533 = vpop.f32.mrb[0].mxu0
        %v1534 = vadd.f32 %v1445, %v1533
        %v1535 = vpop.f32.mrb[0].mxu0
        %1536 = vmatprep.mubr.f32.mxu0 %v1365
        %1537 = vmatmul.mubr.f32.gmra.mrb[0].mxu0 %v1364
        %v1538 = vpop.f32.mrb[0].mxu0
        %v1539 = vadd.f32 %v1445, %v1538
        %v1540 = vpop.f32.mrb[0].mxu0
        %1541 = vmatprep.mubr.f32.mxu0 %v1369
        %1542 = vmatmul.mubr.f32.gmra.mrb[0].mxu0 %v1368
        %v1543 = vpop.f32.mrb[0].mxu0
        %v1544 = vadd.f32 %v1445, %v1543
        %v1545 = vpop.f32.mrb[0].mxu0
        %1546 = vmatprep.mubr.f32.mxu0 %v1373
        %1547 = vmatmul.mubr.f32.gmra.mrb[0].mxu0 %v1372
        %v1548 = vpop.f32.mrb[0].mxu0
        %v1549 = vadd.f32 %v1445, %v1548
        %v1550 = vpop.f32.mrb[0].mxu0
        %1551 = vdwg.mxu0
        %1552 = vmatprep.subr.mxu0 0.0
        %1553 = vmatpush1.msra.mxu0 %v1408
        %1554 = vmatprep.subr.mxu0 0.0
        %1555 = vmatpush1.msra.mxu0 %v1409
        %1556 = vmatprep.subr.mxu0 0.0
        %1557 = vmatpush1.msra.mxu0 %v1410
        %1558 = vmatprep.subr.mxu0 0.0
        %1559 = vmatpush1.msra.mxu0 %v1411
        %1560 = vmatprep.subr.mxu0 0.0
        %1561 = vmatpush1.msra.mxu0 %v1412
        %1562 = vmatprep.subr.mxu0 0.0
        %1563 = vmatpush1.msra.mxu0 %v1413
        %1564 = vmatprep.subr.mxu0 0.0
        %1565 = vmatpush1.msra.mxu0 %v1414
        %1566 = vmatprep.subr.mxu0 0.0
        %1567 = vmatpush1.msra.mxu0 %v1415
        %1568 = vmatprep.subr.mxu0 0.0
        %1569 = vmatpush1.msra.mxu0 %v1416
        %1570 = vmatprep.subr.mxu0 0.0
        %1571 = vmatpush1.msra.mxu0 %v1417
        %1572 = vmatprep.subr.mxu0 0.0
        %1573 = vmatpush1.msra.mxu0 %v1418
        %1574 = vmatprep.subr.mxu0 0.0
        %1575 = vmatpush1.msra.mxu0 %v1419
        %1576 = vmatprep.subr.mxu0 0.0
        %1577 = vmatpush1.msra.mxu0 %v1420
        %1578 = vmatprep.subr.mxu0 0.0
        %1579 = vmatpush1.msra.mxu0 %v1421
        %1580 = vmatprep.subr.mxu0 0.0
        %1581 = vmatpush1.msra.mxu0 %v1422
        %1582 = vmatprep.subr.mxu0 0.0
        %1583 = vmatpush1.msra.mxu0 %v1423
        %1584 = vmatprep.subr.mxu0 0.0
        %1585 = vmatpush1.msra.mxu0 %v1424
        %1586 = vmatprep.subr.mxu0 0.0
        %1587 = vmatpush1.msra.mxu0 %v1425
        %1588 = vmatprep.subr.mxu0 0.0
        %1589 = vmatpush1.msra.mxu0 %v1426
        %1590 = vmatprep.subr.mxu0 0.0
        %1591 = vmatpush1.msra.mxu0 %v1427
        %1592 = vmatprep.subr.mxu0 0.0
        %1593 = vmatpush1.msra.mxu0 %v1428
        %1594 = vmatprep.subr.mxu0 0.0
        %1595 = vmatpush1.msra.mxu0 %v1429
        %1596 = vmatprep.subr.mxu0 0.0
        %1597 = vmatpush1.msra.mxu0 %v1430
        %1598 = vmatprep.subr.mxu0 0.0
        %1599 = vmatpush1.msra.mxu0 %v1431
        %1600 = vmatprep.subr.mxu0 0.0
        %1601 = vmatpush1.msra.mxu0 %v1432
        %1602 = vmatprep.subr.mxu0 0.0
        %1603 = vmatpush1.msra.mxu0 %v1433
        %1604 = vmatprep.subr.mxu0 0.0
        %1605 = vmatpush1.msra.mxu0 %v1434
        %1606 = vmatprep.subr.mxu0 0.0
        %1607 = vmatpush1.msra.mxu0 %v1435
        %1608 = vmatprep.subr.mxu0 0.0
        %1609 = vmatpush1.msra.mxu0 %v1436
        %1610 = vmatprep.subr.mxu0 0.0
        %1611 = vmatpush1.msra.mxu0 %v1437
        %1612 = vmatprep.subr.mxu0 0.0
        %1613 = vmatpush1.msra.mxu0 %v1438
        %1614 = vmatprep.subr.mxu0 0.0
        %1615 = vmatpush1.msra.mxu0 %v1439
        %1616 = vmatprep.mubr.f32.mxu0 %v1347
        %1617 = vmatmul.mubr.f32.gmra.mrb[0].mxu0 %v1346
        %v1618 = vpop.f32.mrb[0].mxu0
        %v1619 = vadd.f32 %v1514, %v1618
        %v1620 = vpop.f32.mrb[0].mxu0
        %1621 = vmatprep.mubr.f32.mxu0 %v1351
        %1622 = vmatmul.mubr.f32.gmra.mrb[0].mxu0 %v1350
        %v1623 = vpop.f32.mrb[0].mxu0
        %v1624 = vadd.f32 %v1519, %v1623
        %v1625 = vpop.f32.mrb[0].mxu0
        %1626 = vmatprep.mubr.f32.mxu0 %v1355
        %1627 = vmatmul.mubr.f32.gmra.mrb[0].mxu0 %v1354
        %v1628 = vpop.f32.mrb[0].mxu0
        %v1629 = vadd.f32 %v1524, %v1628
        %v1630 = vpop.f32.mrb[0].mxu0
        %1631 = vmatprep.mubr.f32.mxu0 %v1359
        %1632 = vmatmul.mubr.f32.gmra.mrb[0].mxu0 %v1358
        %v1633 = vpop.f32.mrb[0].mxu0
        %v1634 = vadd.f32 %v1529, %v1633
        %v1635 = vpop.f32.mrb[0].mxu0
        %1636 = vmatprep.mubr.f32.mxu0 %v1363
        %1637 = vmatmul.mubr.f32.gmra.mrb[0].mxu0 %v1362
        %v1638 = vpop.f32.mrb[0].mxu0
        %v1639 = vadd.f32 %v1534, %v1638
        %v1640 = vpop.f32.mrb[0].mxu0
        %1641 = vmatprep.mubr.f32.mxu0 %v1367
        %1642 = vmatmul.mubr.f32.gmra.mrb[0].mxu0 %v1366
        %v1643 = vpop.f32.mrb[0].mxu0
        %v1644 = vadd.f32 %v1539, %v1643
        %v1645 = vpop.f32.mrb[0].mxu0
        %1646 = vmatprep.mubr.f32.mxu0 %v1371
        %1647 = vmatmul.mubr.f32.gmra.mrb[0].mxu0 %v1370
        %v1648 = vpop.f32.mrb[0].mxu0
        %v1649 = vadd.f32 %v1544, %v1648
        %v1650 = vpop.f32.mrb[0].mxu0
        %1651 = vmatprep.mubr.f32.mxu0 %v1375
        %1652 = vmatmul.mubr.f32.gmra.mrb[0].mxu0 %v1374
        %v1653 = vpop.f32.mrb[0].mxu0
        %v1654 = vadd.f32 %v1549, %v1653
        %v1655 = vpop.f32.mrb[0].mxu0
        %1656 = vdwg.mxu0
        %s1657 = smul.f32 %s509, 0.5
        %s1658 = sadd.f32 %s1657, 1.0
        %v1659 = vstv %s1658
        %v1660 = vmul.f32 %v1659, %v514
        %v1661 = vmul.f32 %v1659, %v515
        %v1662 = vmul.f32 %v1659, %v516
        %v1663 = vmul.f32 %v1659, %v517
        %v1664 = vmul.f32 %v1659, %v518
        %v1665 = vmul.f32 %v1659, %v519
        %v1666 = vmul.f32 %v1659, %v520
        %v1667 = vmul.f32 %v1659, %v521
        %v1668 = vstv %s509
        %v1669 = vmul.f32 %v1668, %v1619
        %v1670 = vmul.f32 %v1668, %v1624
        %v1671 = vmul.f32 %v1668, %v1629
        %v1672 = vmul.f32 %v1668, %v1634
        %v1673 = vmul.f32 %v1668, %v1639
        %v1674 = vmul.f32 %v1668, %v1644
        %v1675 = vmul.f32 %v1668, %v1649
        %v1676 = vmul.f32 %v1668, %v1654
        %v1677 = vadd.f32 %v1660, %v1669
        %v1678 = vadd.f32 %v1661, %v1670
        %v1679 = vadd.f32 %v1662, %v1671
        %v1680 = vadd.f32 %v1663, %v1672
        %v1681 = vadd.f32 %v1664, %v1673
        %v1682 = vadd.f32 %v1665, %v1674
        %v1683 = vadd.f32 %v1666, %v1675
        %v1684 = vadd.f32 %v1667, %v1676
        %v1685 = vld [vmem:[%s446] sm:$0xf]
        %v1686 = vld [vmem:[%s446 + $0x4] sm:$0xf]
        %v1687 = vld [vmem:[%s446 + $0x8] sm:$0xf]
        %v1688 = vld [vmem:[%s446 + $0xc] sm:$0xf]
        %v1689 = vld [vmem:[%s446 + $0x10] sm:$0xf]
        %v1690 = vld [vmem:[%s446 + $0x14] sm:$0xf]
        %v1691 = vld [vmem:[%s446 + $0x18] sm:$0xf]
        %v1692 = vld [vmem:[%s446 + $0x1c] sm:$0xf]
        %v1693 = vunpack.c.l.bf16 %v1685
        %v1694 = vunpack.c.l.bf16 %v1686
        %v1695 = vunpack.c.l.bf16 %v1687
        %v1696 = vunpack.c.l.bf16 %v1688
        %v1697 = vunpack.c.l.bf16 %v1689
        %v1698 = vunpack.c.l.bf16 %v1690
        %v1699 = vunpack.c.l.bf16 %v1691
        %v1700 = vunpack.c.l.bf16 %v1692
        %v1701 = vstv %s513
        %v1702 = vmul.f32 %v1701, %v1693
        %v1703 = vmul.f32 %v1701, %v1694
        %v1704 = vmul.f32 %v1701, %v1695
        %v1705 = vmul.f32 %v1701, %v1696
        %v1706 = vmul.f32 %v1701, %v1697
        %v1707 = vmul.f32 %v1701, %v1698
        %v1708 = vmul.f32 %v1701, %v1699
        %v1709 = vmul.f32 %v1701, %v1700
        %v1710 = vadd.f32 %v1677, %v1702
        %v1711 = vadd.f32 %v1678, %v1703
        %v1712 = vadd.f32 %v1679, %v1704
        %v1713 = vadd.f32 %v1680, %v1705
        %v1714 = vadd.f32 %v1681, %v1706
        %v1715 = vadd.f32 %v1682, %v1707
        %v1716 = vadd.f32 %v1683, %v1708
        %v1717 = vadd.f32 %v1684, %v1709
        %1718 = vst [vmem:[%s502] sm:$0xff] %v1710
        %1719 = vst [vmem:[%s502 + $0x8] sm:$0xff] %v1711
        %1720 = vst [vmem:[%s502 + $0x10] sm:$0xff] %v1712
        %1721 = vst [vmem:[%s502 + $0x18] sm:$0xff] %v1713
        %1722 = vst [vmem:[%s502 + $0x20] sm:$0xff] %v1714
        %1723 = vst [vmem:[%s502 + $0x28] sm:$0xff] %v1715
        %1724 = vst [vmem:[%s502 + $0x30] sm:$0xff] %v1716
        %1725 = vst [vmem:[%s502 + $0x38] sm:$0xff] %v1717
        %s1726 = sand.u32 %s268, 1
        %s1727 = scalar_lea.sflag [#allocation6], %s1726
        %s1728 = sand.u32 %s268, 1
        %s1729 = smul.addr %s1728, 64
        %s1730 = scalar_lea.vmem [#allocation15], %s1729
        // Predicated region
        $region81: #{tpu_custom_call.1} parent=55 // pred_check
          %p1731 = pneg %p278
        $region82: #{tpu_custom_call.1} parent=55 // pred_check_branch
          %1733 = sbr.rel (%p1731) target = $region84
        $region83: #{tpu_custom_call.1} parent=55 // pred_region
          %s1734 = smul.u32 8, %s41
          %s1736 = ssub.s32 1024, 1024
          %1737 = vsyncadd %s1727, %s1736
          %s1738 = smul.addr %s40, 8
          %s1739 = sadd.s32 %s1734, %s1738
          %s1740 = smul.addr %s1739, 128
          %s1741 = scalar_lea.hbm %s10, %s1740
          %s1742 = sshll.u32 %s1730, 4
          %s1743 = int_to_ptr.vmem [resolvable:$true] %s1742
          %1748 = dma.vmem_to_hbm [thread:$0]  %s1743, 1024, %s1741, %s1727, 128, 128, 8
        $region84: #{tpu_custom_call.1} parent=55 // pred_fallthru
          _
      $region56: #{tpu_custom_call.1} parent=5 // pred_fallthru
        _
      %p1749 = scmp.le.s32.totalorder 2, %s31
      // Predicated region
      $region85: #{tpu_custom_call.1} parent=5 // pred_check
        %p1750 = pneg %p1749
      $region86: #{tpu_custom_call.1} parent=5 // pred_check_branch
        %1752 = sbr.rel (%p1750) target = $region88
      $region87: #{tpu_custom_call.1} parent=5 // pred_region
        %s1753 = ssub.s32 %s31, 2
        // Predicated region
        $region89: #{tpu_custom_call.1} parent=87 // pred_check
          %p1754 = pneg %p284
        $region90: #{tpu_custom_call.1} parent=87 // pred_check_branch
          %1756 = sbr.rel (%p1754) target = $region92
        $region91: #{tpu_custom_call.1} parent=87 // pred_region
          %s1757 = sand.u32 %s269, 1
          %s1758 = scalar_lea.sflag [#allocation6], %s1757
          %s1759 = sand.u32 %s269, 1
          %s1760 = smul.addr %s1759, 64
          %s1761 = scalar_lea.vmem [#allocation15], %s1760
          %1762 = dma.done %s1758, 1024
        $region92: #{tpu_custom_call.1} parent=87 // pred_fallthru
          _
      $region88: #{tpu_custom_call.1} parent=5 // pred_fallthru
        _
    $region6: #{tpu_custom_call.1} parent=1 // loop_footer
      %s35 = sadd.s32 1, %s31
    $region7: #{tpu_custom_call.1} parent=1 // loop_footer_branch
      %30 = sbr.rel target = $region3
    $region8: #{tpu_custom_call.1} parent=1 // loop_exit
      _
    %1763 = vsyncpa [#allocation5], 1
    %s1764 = scalar_lea.sflag [#allocation5], 1
    %1765 = vsyncpa %s1764, 1
    %1766 = vsyncpa [#allocation8], 1
    %s1767 = scalar_lea.sflag [#allocation8], 1
    %1768 = vsyncpa %s1767, 1
    %1769 = vsyncpa [#allocation11], 1
    %1770 = vsyncpa [#allocation14], 1
    %1771 = vsyncpa [#allocation6], 1
    %s1772 = scalar_lea.sflag [#allocation6], 1
    %1773 = vsyncpa %s1772, 1

</llo_original>
